<compile_context>
chip_gen: v7x
topology: tpu7x:2x2x1
jax: 0.10.0
libtpu: 0.0.40
codegen_flags: <defaults>
</compile_context>

<pallas_src>
import functools

import jax
import jax.numpy as jnp
from jax.experimental import pallas as pl
from jax.experimental.pallas import tpu as pltpu


def _round_up(n, m):
    return (n + m - 1) // m * m


def _default_conv_dtype():
    """bf16 conv taps only where the VPU runs bf16 natively (v6e / v7x)."""
    try:
        kind = jax.devices()[0].device_kind.lower()
    except Exception:
        return jnp.float32
    return jnp.bfloat16 if any(t in kind for t in ("v6", "v7", "7x")) else jnp.float32


def _webphish_kernel(x_ref, wc_ref, bc_ref, w1t_ref, b1_ref, w2_ref, b2_ref,
                     o_ref, pooled_ref, *, num_filters, k, pad, valid_len):
    # x_ref      : (b_blk, Lp) conv dtype — lane-dense input block (zeros past L)
    # wc_ref     : (F*k,)      f32, SMEM  — conv weights, read as scalar splats
    # bc_ref     : (1, F)      f32        — conv bias
    # w1t_ref    : (F, 32)     f32        — fc1 weight, transposed
    # b1_ref     : (1, 32)     f32
    # w2_ref     : (1, 32)     f32        — fc2 weight row (VPU path)
    # b2_ref     : (1, 1)      f32
    # o_ref      : (b_blk, 128) f32       — lane-dense output (result broadcast)
    # pooled_ref : (b_blk, F)  f32 VMEM scratch
    cdt = x_ref.dtype
    b_blk, Lp = x_ref.shape
    x0 = x_ref[...]

    # Conv1d taps as lane rolls of the single input block. The zero padding in
    # lanes [L, Lp) makes the circular wrap reproduce Conv1d's zero padding at
    # both edges (wrapper guarantees L + pad <= Lp).
    taps = []
    for j in range(k):
        shift = (pad - j) % Lp
        taps.append(x0 if shift == 0 else pltpu.roll(x0, shift=shift, axis=1))

    # Lane-validity mask, built once per block. Padded lanes must be -inf (not
    # 0) before the max: the pre-bias conv values can all be negative.
    lane = jax.lax.broadcasted_iota(jnp.int32, (b_blk, Lp), 1)
    valid = lane < valid_len

    # Fused Conv1d + AdaptiveMaxPool1d(1): one slab per filter, reduced
    # immediately; weights are scalar splats from SMEM so the activation keeps
    # its native batch-on-sublane / length-on-lane layout.
    for f in range(num_filters):
        acc = taps[0] * wc_ref[f * k + 0].astype(cdt)
        for j in range(1, k):
            acc = acc + taps[j] * wc_ref[f * k + j].astype(cdt)
        mx = jnp.max(jnp.where(valid, acc, float("-inf")), axis=-1, keepdims=True)
        pooled_ref[:, f:f + 1] = mx.astype(jnp.float32)

    # Hoisted conv bias + ReLU (ReLU monotone, bias constant over L, so
    # relu(max_l(conv_l) + b) == max_l(relu(conv_l + b))).
    pooled = jnp.maximum(pooled_ref[...] + bc_ref[...], 0.0)        # (b_blk, F)

    # fc1 + ReLU on the MXU.
    # TODO(synk): Dropout(p=0.3) omitted — forward implemented for inference.
    h1 = jnp.dot(pooled, w1t_ref[...],
                 preferred_element_type=jnp.float32) + b1_ref[...]
    h1 = jnp.maximum(h1, 0.0)                                       # (b_blk, 32)

    # fc2 + sigmoid: N=1, so VPU multiply + lane-sum (skips the MXU drain).
    logit = jnp.sum(h1 * w2_ref[...], axis=-1, keepdims=True) + b2_ref[...]
    # Lane-dense store: broadcast the (b_blk, 1) result across all 128 lanes.
    o_ref[...] = jnp.broadcast_to(jax.nn.sigmoid(logit), o_ref.shape)


def webphish_cnn_forward(x, params, *, b_blk=None, conv_dtype=None):
    """x: (B, d_in) float32 -> (B, 1) float32 sigmoid probabilities."""
    B, d_in = x.shape
    wc = params["conv_w"].astype(jnp.float32)             # (F, k)
    F, k = wc.shape
    pad = k // 2
    if conv_dtype is None:
        conv_dtype = _default_conv_dtype()

    # Lane-dense length: L + pad <= Lp so in-kernel rolls wrap into zero lanes.
    Lp = _round_up(d_in + pad, 128)

    # Batch tile: 16-row aligned (bf16 sublane packing), capped at 256 so the
    # per-filter slab stays within the vreg file, and chosen so >=2 grid blocks
    # exist whenever B allows it (v7x megacore shards the parallel axis).
    if b_blk is None:
        target = max(_round_up(B, 16) // 2, 16)
        b_blk = min(256, _round_up(target, 16))
    b_blk = max(16, _round_up(b_blk, 16))
    B_pad = _round_up(B, b_blk)

    xp = jnp.zeros((B_pad, Lp), conv_dtype).at[:B, :d_in].set(x.astype(conv_dtype))

    wc_flat = wc.reshape(-1)                               # (F*k,) -> SMEM scalars
    bc = params["conv_b"].reshape(1, F).astype(jnp.float32)
    w1t = params["fc1_w"].astype(jnp.float32).T            # (F, 32)
    h1_dim = w1t.shape[1]
    b1 = params["fc1_b"].reshape(1, h1_dim).astype(jnp.float32)
    w2 = params["fc2_w"].reshape(1, h1_dim).astype(jnp.float32)
    b2 = params["fc2_b"].reshape(1, 1).astype(jnp.float32)

    grid = (B_pad // b_blk,)
    pinned = lambda shape: pl.BlockSpec(shape, lambda i: (0, 0))
    kernel = functools.partial(_webphish_kernel, num_filters=F, k=k, pad=pad,
                               valid_len=d_in)

    out = pl.pallas_call(
        kernel,
        out_shape=jax.ShapeDtypeStruct((B_pad, 128), jnp.float32),
        grid=grid,
        in_specs=[
            pl.BlockSpec((b_blk, Lp), lambda i: (i, 0)),            # x (tiled)
            pl.BlockSpec(memory_space=pltpu.MemorySpace.SMEM),      # conv w
            pinned((1, F)),                                         # conv b
            pinned((F, h1_dim)),                                    # fc1 w^T
            pinned((1, h1_dim)),                                    # fc1 b
            pinned((1, h1_dim)),                                    # fc2 w row
            pinned((1, 1)),                                         # fc2 b
        ],
        out_specs=pl.BlockSpec((b_blk, 128), lambda i: (i, 0)),
        scratch_shapes=[pltpu.VMEM((b_blk, F), jnp.float32)],
        compiler_params=pltpu.CompilerParams(
            dimension_semantics=("parallel",),
            vmem_limit_bytes=32 * 1024 * 1024,
        ),
    )(xp, wc_flat, bc, w1t, b1, w2, b2)
    return out[:B, :1]


def init_params(key, d_in, num_filters=32, k=3):
    """Deterministic synthetic parameters matching WebPhishCNN shapes."""
    ks = jax.random.split(key, 6)
    return {
        "conv_w": jax.random.normal(ks[0], (num_filters, k), jnp.float32) * 0.3,
        "conv_b": jax.random.normal(ks[1], (num_filters,), jnp.float32) * 0.1,
        "fc1_w": jax.random.normal(ks[2], (32, num_filters), jnp.float32) * 0.2,
        "fc1_b": jax.random.normal(ks[3], (32,), jnp.float32) * 0.1,
        "fc2_w": jax.random.normal(ks[4], (1, 32), jnp.float32) * 0.2,
        "fc2_b": jax.random.normal(ks[5], (1,), jnp.float32) * 0.1,
    }


def _reference_forward(x, params):
    """Pure-JAX reference mirroring the PyTorch module (eval mode), original op
    order (bias + ReLU before the max-pool)."""
    k = params["conv_w"].shape[1]
    pad = k // 2
    xp = jnp.pad(x, ((0, 0), (pad, pad)))
    B, L = x.shape
    F = params["conv_w"].shape[0]
    conv = jnp.zeros((B, F, L), jnp.float32)
    for j in range(k):
        conv = conv + xp[:, None, j:j + L] * params["conv_w"][None, :, j:j + 1]
    conv = conv + params["conv_b"][None, :, None]
    pooled = jnp.max(jnp.maximum(conv, 0.0), axis=-1)
    h1 = jnp.maximum(pooled @ params["fc1_w"].T + params["fc1_b"], 0.0)
    return jax.nn.sigmoid(h1 @ params["fc2_w"].T + params["fc2_b"])


if __name__ == "__main__":
    key = jax.random.PRNGKey(0)
    kx, kp, kx2 = jax.random.split(key, 3)

    B, d_in = 8, 80                       # URL variant: 80 input features
    x = jax.random.normal(kx, (B, d_in), jnp.float32)
    params = init_params(kp, d_in, num_filters=32, k=3)
    ref = _reference_forward(x, params)

    # f32 path (valid on every TPU generation) — tight tolerance.
    out = jax.block_until_ready(
        webphish_cnn_forward(x, params, conv_dtype=jnp.float32))
    assert out.shape == (B, 1)
    assert jnp.allclose(out, ref, atol=1e-5, rtol=1e-5), "f32 kernel mismatch"

    # Auto dtype (bf16 conv taps on v6e/v7x, f32 elsewhere) — loose tolerance.
    out_auto = jax.block_until_ready(webphish_cnn_forward(x, params))
    assert out_auto.shape == (B, 1)
    assert jnp.allclose(out_auto, ref, atol=2e-2), "auto-dtype kernel mismatch"

    # Multi-block grid + batch-padding path (B not a multiple of the tile).
    B2 = 50
    x2 = jax.random.normal(kx2, (B2, d_in), jnp.float32)
    out2 = jax.block_until_ready(
        webphish_cnn_forward(x2, params, conv_dtype=jnp.float32))
    ref2 = _reference_forward(x2, params)
    assert out2.shape == (B2, 1)
    assert jnp.allclose(out2, ref2, atol=1e-5, rtol=1e-5), "multi-block mismatch"

    print("KERNEL_OK")
</pallas_src>

<mosaic_0001>
module attributes {stable_mosaic.version = 11 : i64} {
  func.func @_webphish_kernel(%arg0: i32, %arg1: memref<16x128xf32, #tpu.memory_space<vmem>>, %arg2: memref<96xf32, #tpu.memory_space<smem>>, %arg3: memref<1x32xf32, #tpu.memory_space<vmem>>, %arg4: memref<32x32xf32, #tpu.memory_space<vmem>>, %arg5: memref<1x32xf32, #tpu.memory_space<vmem>>, %arg6: memref<1x32xf32, #tpu.memory_space<vmem>>, %arg7: memref<1x1xf32, #tpu.memory_space<vmem>>, %arg8: memref<16x128xf32, #tpu.memory_space<vmem>>, %arg9: memref<16x32xf32, #tpu.memory_space<vmem>>) attributes {dimension_semantics = [#tpu.dimension_semantics<parallel>], iteration_bounds = array<i64: 1>, scalar_prefetch = 0 : i64, scratch_operands = 1 : i64, tpu.core_type = #tpu.core_type<tc>, window_params = [{transform_indices = @transform_0, window_bounds = array<i64: 16, 128>}, {transform_indices = @transform_1, window_bounds = array<i64: 96>}, {pipeline_mode = #tpu.pipeline_mode<synchronous>, transform_indices = @transform_2, window_bounds = array<i64: 1, 32>}, {pipeline_mode = #tpu.pipeline_mode<synchronous>, transform_indices = @transform_3, window_bounds = array<i64: 32, 32>}, {pipeline_mode = #tpu.pipeline_mode<synchronous>, transform_indices = @transform_4, window_bounds = array<i64: 1, 32>}, {pipeline_mode = #tpu.pipeline_mode<synchronous>, transform_indices = @transform_5, window_bounds = array<i64: 1, 32>}, {pipeline_mode = #tpu.pipeline_mode<synchronous>, transform_indices = @transform_6, window_bounds = array<i64: 1, 1>}, {transform_indices = @transform_7, window_bounds = array<i64: 16, 128>}]} {
    %c0 = arith.constant 0 : index
    %c0_0 = arith.constant 0 : index
    %0 = vector.load %arg1[%c0, %c0_0] : memref<16x128xf32, #tpu.memory_space<vmem>>, vector<16x128xf32>
    %c1_i32 = arith.constant 1 : i32
    %1 = tpu.dynamic_rotate %0 by %c1_i32 dim 1 : vector<16x128xf32>, i32 -> vector<16x128xf32>
    %c127_i32 = arith.constant 127 : i32
    %2 = tpu.dynamic_rotate %0 by %c127_i32 dim 1 : vector<16x128xf32>, i32 -> vector<16x128xf32>
    %3 = tpu.iota {dimensions = array<i32: 1>} : vector<16x128xi32>
    %c80_i32 = arith.constant 80 : i32
    %4 = vector.broadcast %c80_i32 : i32 to vector<16x128xi32>
    %5 = arith.cmpi slt, %3, %4 : vector<16x128xi32>
    %c0_1 = arith.constant 0 : index
    %6 = memref.load %arg2[%c0_1] : memref<96xf32, #tpu.memory_space<smem>>
    %7 = vector.broadcast %6 : f32 to vector<16x128xf32>
    %8 = arith.mulf %1, %7 : vector<16x128xf32>
    %c1 = arith.constant 1 : index
    %9 = memref.load %arg2[%c1] : memref<96xf32, #tpu.memory_space<smem>>
    %10 = vector.broadcast %9 : f32 to vector<16x128xf32>
    %11 = arith.mulf %0, %10 : vector<16x128xf32>
    %12 = arith.addf %8, %11 : vector<16x128xf32>
    %c2 = arith.constant 2 : index
    %13 = memref.load %arg2[%c2] : memref<96xf32, #tpu.memory_space<smem>>
    %14 = vector.broadcast %13 : f32 to vector<16x128xf32>
    %15 = arith.mulf %2, %14 : vector<16x128xf32>
    %16 = arith.addf %12, %15 : vector<16x128xf32>
    %cst = arith.constant 0xFF800000 : f32
    %17 = vector.broadcast %cst : f32 to vector<16x128xf32>
    %18 = arith.select %5, %16, %17 : vector<16x128xi1>, vector<16x128xf32>
    %cst_2 = arith.constant dense<0xFF800000> : vector<16xf32>
    %19 = vector.multi_reduction <maximumf>, %18, %cst_2 [1] : vector<16x128xf32> to vector<16xf32>
    %20 = vector.shape_cast %19 : vector<16xf32> to vector<16x1xf32>
    %c0_3 = arith.constant 0 : index
    %c0_4 = arith.constant 0 : index
    %21 = vector.load %arg9[%c0_3, %c0_4] : memref<16x32xf32, #tpu.memory_space<vmem>>, vector<16x1xf32>
    tpu.vector_store %arg9[%c0_3, %c0_4], %20 {strides = array<i32>} : memref<16x32xf32, #tpu.memory_space<vmem>>, vector<16x1xf32>,
    %c3 = arith.constant 3 : index
    %22 = memref.load %arg2[%c3] : memref<96xf32, #tpu.memory_space<smem>>
    %23 = vector.broadcast %22 : f32 to vector<16x128xf32>
    %24 = arith.mulf %1, %23 : vector<16x128xf32>
    %c4 = arith.constant 4 : index
    %25 = memref.load %arg2[%c4] : memref<96xf32, #tpu.memory_space<smem>>
    %26 = vector.broadcast %25 : f32 to vector<16x128xf32>
    %27 = arith.mulf %0, %26 : vector<16x128xf32>
    %28 = arith.addf %24, %27 : vector<16x128xf32>
    %c5 = arith.constant 5 : index
    %29 = memref.load %arg2[%c5] : memref<96xf32, #tpu.memory_space<smem>>
    %30 = vector.broadcast %29 : f32 to vector<16x128xf32>
    %31 = arith.mulf %2, %30 : vector<16x128xf32>
    %32 = arith.addf %28, %31 : vector<16x128xf32>
    %cst_5 = arith.constant 0xFF800000 : f32
    %33 = vector.broadcast %cst_5 : f32 to vector<16x128xf32>
    %34 = arith.select %5, %32, %33 : vector<16x128xi1>, vector<16x128xf32>
    %cst_6 = arith.constant dense<0xFF800000> : vector<16xf32>
    %35 = vector.multi_reduction <maximumf>, %34, %cst_6 [1] : vector<16x128xf32> to vector<16xf32>
    %36 = vector.shape_cast %35 : vector<16xf32> to vector<16x1xf32>
    %c0_7 = arith.constant 0 : index
    %c1_8 = arith.constant 1 : index
    %37 = vector.load %arg9[%c0_7, %c1_8] : memref<16x32xf32, #tpu.memory_space<vmem>>, vector<16x1xf32>
    tpu.vector_store %arg9[%c0_7, %c1_8], %36 {strides = array<i32>} : memref<16x32xf32, #tpu.memory_space<vmem>>, vector<16x1xf32>,
    %c6 = arith.constant 6 : index
    %38 = memref.load %arg2[%c6] : memref<96xf32, #tpu.memory_space<smem>>
    %39 = vector.broadcast %38 : f32 to vector<16x128xf32>
    %40 = arith.mulf %1, %39 : vector<16x128xf32>
    %c7 = arith.constant 7 : index
    %41 = memref.load %arg2[%c7] : memref<96xf32, #tpu.memory_space<smem>>
    %42 = vector.broadcast %41 : f32 to vector<16x128xf32>
    %43 = arith.mulf %0, %42 : vector<16x128xf32>
    %44 = arith.addf %40, %43 : vector<16x128xf32>
    %c8 = arith.constant 8 : index
    %45 = memref.load %arg2[%c8] : memref<96xf32, #tpu.memory_space<smem>>
    %46 = vector.broadcast %45 : f32 to vector<16x128xf32>
    %47 = arith.mulf %2, %46 : vector<16x128xf32>
    %48 = arith.addf %44, %47 : vector<16x128xf32>
    %cst_9 = arith.constant 0xFF800000 : f32
    %49 = vector.broadcast %cst_9 : f32 to vector<16x128xf32>
    %50 = arith.select %5, %48, %49 : vector<16x128xi1>, vector<16x128xf32>
    %cst_10 = arith.constant dense<0xFF800000> : vector<16xf32>
    %51 = vector.multi_reduction <maximumf>, %50, %cst_10 [1] : vector<16x128xf32> to vector<16xf32>
    %52 = vector.shape_cast %51 : vector<16xf32> to vector<16x1xf32>
    %c0_11 = arith.constant 0 : index
    %c2_12 = arith.constant 2 : index
    %53 = vector.load %arg9[%c0_11, %c2_12] : memref<16x32xf32, #tpu.memory_space<vmem>>, vector<16x1xf32>
    tpu.vector_store %arg9[%c0_11, %c2_12], %52 {strides = array<i32>} : memref<16x32xf32, #tpu.memory_space<vmem>>, vector<16x1xf32>,
    %c9 = arith.constant 9 : index
    %54 = memref.load %arg2[%c9] : memref<96xf32, #tpu.memory_space<smem>>
    %55 = vector.broadcast %54 : f32 to vector<16x128xf32>
    %56 = arith.mulf %1, %55 : vector<16x128xf32>
    %c10 = arith.constant 10 : index
    %57 = memref.load %arg2[%c10] : memref<96xf32, #tpu.memory_space<smem>>
    %58 = vector.broadcast %57 : f32 to vector<16x128xf32>
    %59 = arith.mulf %0, %58 : vector<16x128xf32>
    %60 = arith.addf %56, %59 : vector<16x128xf32>
    %c11 = arith.constant 11 : index
    %61 = memref.load %arg2[%c11] : memref<96xf32, #tpu.memory_space<smem>>
    %62 = vector.broadcast %61 : f32 to vector<16x128xf32>
    %63 = arith.mulf %2, %62 : vector<16x128xf32>
    %64 = arith.addf %60, %63 : vector<16x128xf32>
    %cst_13 = arith.constant 0xFF800000 : f32
    %65 = vector.broadcast %cst_13 : f32 to vector<16x128xf32>
    %66 = arith.select %5, %64, %65 : vector<16x128xi1>, vector<16x128xf32>
    %cst_14 = arith.constant dense<0xFF800000> : vector<16xf32>
    %67 = vector.multi_reduction <maximumf>, %66, %cst_14 [1] : vector<16x128xf32> to vector<16xf32>
    %68 = vector.shape_cast %67 : vector<16xf32> to vector<16x1xf32>
    %c0_15 = arith.constant 0 : index
    %c3_16 = arith.constant 3 : index
    %69 = vector.load %arg9[%c0_15, %c3_16] : memref<16x32xf32, #tpu.memory_space<vmem>>, vector<16x1xf32>
    tpu.vector_store %arg9[%c0_15, %c3_16], %68 {strides = array<i32>} : memref<16x32xf32, #tpu.memory_space<vmem>>, vector<16x1xf32>,
    %c12 = arith.constant 12 : index
    %70 = memref.load %arg2[%c12] : memref<96xf32, #tpu.memory_space<smem>>
    %71 = vector.broadcast %70 : f32 to vector<16x128xf32>
    %72 = arith.mulf %1, %71 : vector<16x128xf32>
    %c13 = arith.constant 13 : index
    %73 = memref.load %arg2[%c13] : memref<96xf32, #tpu.memory_space<smem>>
    %74 = vector.broadcast %73 : f32 to vector<16x128xf32>
    %75 = arith.mulf %0, %74 : vector<16x128xf32>
    %76 = arith.addf %72, %75 : vector<16x128xf32>
    %c14 = arith.constant 14 : index
    %77 = memref.load %arg2[%c14] : memref<96xf32, #tpu.memory_space<smem>>
    %78 = vector.broadcast %77 : f32 to vector<16x128xf32>
    %79 = arith.mulf %2, %78 : vector<16x128xf32>
    %80 = arith.addf %76, %79 : vector<16x128xf32>
    %cst_17 = arith.constant 0xFF800000 : f32
    %81 = vector.broadcast %cst_17 : f32 to vector<16x128xf32>
    %82 = arith.select %5, %80, %81 : vector<16x128xi1>, vector<16x128xf32>
    %cst_18 = arith.constant dense<0xFF800000> : vector<16xf32>
    %83 = vector.multi_reduction <maximumf>, %82, %cst_18 [1] : vector<16x128xf32> to vector<16xf32>
    %84 = vector.shape_cast %83 : vector<16xf32> to vector<16x1xf32>
    %c0_19 = arith.constant 0 : index
    %c4_20 = arith.constant 4 : index
    %85 = vector.load %arg9[%c0_19, %c4_20] : memref<16x32xf32, #tpu.memory_space<vmem>>, vector<16x1xf32>
    tpu.vector_store %arg9[%c0_19, %c4_20], %84 {strides = array<i32>} : memref<16x32xf32, #tpu.memory_space<vmem>>, vector<16x1xf32>,
    %c15 = arith.constant 15 : index
    %86 = memref.load %arg2[%c15] : memref<96xf32, #tpu.memory_space<smem>>
    %87 = vector.broadcast %86 : f32 to vector<16x128xf32>
    %88 = arith.mulf %1, %87 : vector<16x128xf32>
    %c16 = arith.constant 16 : index
    %89 = memref.load %arg2[%c16] : memref<96xf32, #tpu.memory_space<smem>>
    %90 = vector.broadcast %89 : f32 to vector<16x128xf32>
    %91 = arith.mulf %0, %90 : vector<16x128xf32>
    %92 = arith.addf %88, %91 : vector<16x128xf32>
    %c17 = arith.constant 17 : index
    %93 = memref.load %arg2[%c17] : memref<96xf32, #tpu.memory_space<smem>>
    %94 = vector.broadcast %93 : f32 to vector<16x128xf32>
    %95 = arith.mulf %2, %94 : vector<16x128xf32>
    %96 = arith.addf %92, %95 : vector<16x128xf32>
    %cst_21 = arith.constant 0xFF800000 : f32
    %97 = vector.broadcast %cst_21 : f32 to vector<16x128xf32>
    %98 = arith.select %5, %96, %97 : vector<16x128xi1>, vector<16x128xf32>
    %cst_22 = arith.constant dense<0xFF800000> : vector<16xf32>
    %99 = vector.multi_reduction <maximumf>, %98, %cst_22 [1] : vector<16x128xf32> to vector<16xf32>
    %100 = vector.shape_cast %99 : vector<16xf32> to vector<16x1xf32>
    %c0_23 = arith.constant 0 : index
    %c5_24 = arith.constant 5 : index
    %101 = vector.load %arg9[%c0_23, %c5_24] : memref<16x32xf32, #tpu.memory_space<vmem>>, vector<16x1xf32>
    tpu.vector_store %arg9[%c0_23, %c5_24], %100 {strides = array<i32>} : memref<16x32xf32, #tpu.memory_space<vmem>>, vector<16x1xf32>,
    %c18 = arith.constant 18 : index
    %102 = memref.load %arg2[%c18] : memref<96xf32, #tpu.memory_space<smem>>
    %103 = vector.broadcast %102 : f32 to vector<16x128xf32>
    %104 = arith.mulf %1, %103 : vector<16x128xf32>
    %c19 = arith.constant 19 : index
    %105 = memref.load %arg2[%c19] : memref<96xf32, #tpu.memory_space<smem>>
    %106 = vector.broadcast %105 : f32 to vector<16x128xf32>
    %107 = arith.mulf %0, %106 : vector<16x128xf32>
    %108 = arith.addf %104, %107 : vector<16x128xf32>
    %c20 = arith.constant 20 : index
    %109 = memref.load %arg2[%c20] : memref<96xf32, #tpu.memory_space<smem>>
    %110 = vector.broadcast %109 : f32 to vector<16x128xf32>
    %111 = arith.mulf %2, %110 : vector<16x128xf32>
    %112 = arith.addf %108, %111 : vector<16x128xf32>
    %cst_25 = arith.constant 0xFF800000 : f32
    %113 = vector.broadcast %cst_25 : f32 to vector<16x128xf32>
    %114 = arith.select %5, %112, %113 : vector<16x128xi1>, vector<16x128xf32>
    %cst_26 = arith.constant dense<0xFF800000> : vector<16xf32>
    %115 = vector.multi_reduction <maximumf>, %114, %cst_26 [1] : vector<16x128xf32> to vector<16xf32>
    %116 = vector.shape_cast %115 : vector<16xf32> to vector<16x1xf32>
    %c0_27 = arith.constant 0 : index
    %c6_28 = arith.constant 6 : index
    %117 = vector.load %arg9[%c0_27, %c6_28] : memref<16x32xf32, #tpu.memory_space<vmem>>, vector<16x1xf32>
    tpu.vector_store %arg9[%c0_27, %c6_28], %116 {strides = array<i32>} : memref<16x32xf32, #tpu.memory_space<vmem>>, vector<16x1xf32>,
    %c21 = arith.constant 21 : index
    %118 = memref.load %arg2[%c21] : memref<96xf32, #tpu.memory_space<smem>>
    %119 = vector.broadcast %118 : f32 to vector<16x128xf32>
    %120 = arith.mulf %1, %119 : vector<16x128xf32>
    %c22 = arith.constant 22 : index
    %121 = memref.load %arg2[%c22] : memref<96xf32, #tpu.memory_space<smem>>
    %122 = vector.broadcast %121 : f32 to vector<16x128xf32>
    %123 = arith.mulf %0, %122 : vector<16x128xf32>
    %124 = arith.addf %120, %123 : vector<16x128xf32>
    %c23 = arith.constant 23 : index
    %125 = memref.load %arg2[%c23] : memref<96xf32, #tpu.memory_space<smem>>
    %126 = vector.broadcast %125 : f32 to vector<16x128xf32>
    %127 = arith.mulf %2, %126 : vector<16x128xf32>
    %128 = arith.addf %124, %127 : vector<16x128xf32>
    %cst_29 = arith.constant 0xFF800000 : f32
    %129 = vector.broadcast %cst_29 : f32 to vector<16x128xf32>
    %130 = arith.select %5, %128, %129 : vector<16x128xi1>, vector<16x128xf32>
    %cst_30 = arith.constant dense<0xFF800000> : vector<16xf32>
    %131 = vector.multi_reduction <maximumf>, %130, %cst_30 [1] : vector<16x128xf32> to vector<16xf32>
    %132 = vector.shape_cast %131 : vector<16xf32> to vector<16x1xf32>
    %c0_31 = arith.constant 0 : index
    %c7_32 = arith.constant 7 : index
    %133 = vector.load %arg9[%c0_31, %c7_32] : memref<16x32xf32, #tpu.memory_space<vmem>>, vector<16x1xf32>
    tpu.vector_store %arg9[%c0_31, %c7_32], %132 {strides = array<i32>} : memref<16x32xf32, #tpu.memory_space<vmem>>, vector<16x1xf32>,
    %c24 = arith.constant 24 : index
    %134 = memref.load %arg2[%c24] : memref<96xf32, #tpu.memory_space<smem>>
    %135 = vector.broadcast %134 : f32 to vector<16x128xf32>
    %136 = arith.mulf %1, %135 : vector<16x128xf32>
    %c25 = arith.constant 25 : index
    %137 = memref.load %arg2[%c25] : memref<96xf32, #tpu.memory_space<smem>>
    %138 = vector.broadcast %137 : f32 to vector<16x128xf32>
    %139 = arith.mulf %0, %138 : vector<16x128xf32>
    %140 = arith.addf %136, %139 : vector<16x128xf32>
    %c26 = arith.constant 26 : index
    %141 = memref.load %arg2[%c26] : memref<96xf32, #tpu.memory_space<smem>>
    %142 = vector.broadcast %141 : f32 to vector<16x128xf32>
    %143 = arith.mulf %2, %142 : vector<16x128xf32>
    %144 = arith.addf %140, %143 : vector<16x128xf32>
    %cst_33 = arith.constant 0xFF800000 : f32
    %145 = vector.broadcast %cst_33 : f32 to vector<16x128xf32>
    %146 = arith.select %5, %144, %145 : vector<16x128xi1>, vector<16x128xf32>
    %cst_34 = arith.constant dense<0xFF800000> : vector<16xf32>
    %147 = vector.multi_reduction <maximumf>, %146, %cst_34 [1] : vector<16x128xf32> to vector<16xf32>
    %148 = vector.shape_cast %147 : vector<16xf32> to vector<16x1xf32>
    %c0_35 = arith.constant 0 : index
    %c8_36 = arith.constant 8 : index
    %149 = vector.load %arg9[%c0_35, %c8_36] : memref<16x32xf32, #tpu.memory_space<vmem>>, vector<16x1xf32>
    tpu.vector_store %arg9[%c0_35, %c8_36], %148 {strides = array<i32>} : memref<16x32xf32, #tpu.memory_space<vmem>>, vector<16x1xf32>,
    %c27 = arith.constant 27 : index
    %150 = memref.load %arg2[%c27] : memref<96xf32, #tpu.memory_space<smem>>
    %151 = vector.broadcast %150 : f32 to vector<16x128xf32>
    %152 = arith.mulf %1, %151 : vector<16x128xf32>
    %c28 = arith.constant 28 : index
    %153 = memref.load %arg2[%c28] : memref<96xf32, #tpu.memory_space<smem>>
    %154 = vector.broadcast %153 : f32 to vector<16x128xf32>
    %155 = arith.mulf %0, %154 : vector<16x128xf32>
    %156 = arith.addf %152, %155 : vector<16x128xf32>
    %c29 = arith.constant 29 : index
    %157 = memref.load %arg2[%c29] : memref<96xf32, #tpu.memory_space<smem>>
    %158 = vector.broadcast %157 : f32 to vector<16x128xf32>
    %159 = arith.mulf %2, %158 : vector<16x128xf32>
    %160 = arith.addf %156, %159 : vector<16x128xf32>
    %cst_37 = arith.constant 0xFF800000 : f32
    %161 = vector.broadcast %cst_37 : f32 to vector<16x128xf32>
    %162 = arith.select %5, %160, %161 : vector<16x128xi1>, vector<16x128xf32>
    %cst_38 = arith.constant dense<0xFF800000> : vector<16xf32>
    %163 = vector.multi_reduction <maximumf>, %162, %cst_38 [1] : vector<16x128xf32> to vector<16xf32>
    %164 = vector.shape_cast %163 : vector<16xf32> to vector<16x1xf32>
    %c0_39 = arith.constant 0 : index
    %c9_40 = arith.constant 9 : index
    %165 = vector.load %arg9[%c0_39, %c9_40] : memref<16x32xf32, #tpu.memory_space<vmem>>, vector<16x1xf32>
    tpu.vector_store %arg9[%c0_39, %c9_40], %164 {strides = array<i32>} : memref<16x32xf32, #tpu.memory_space<vmem>>, vector<16x1xf32>,
    %c30 = arith.constant 30 : index
    %166 = memref.load %arg2[%c30] : memref<96xf32, #tpu.memory_space<smem>>
    %167 = vector.broadcast %166 : f32 to vector<16x128xf32>
    %168 = arith.mulf %1, %167 : vector<16x128xf32>
    %c31 = arith.constant 31 : index
    %169 = memref.load %arg2[%c31] : memref<96xf32, #tpu.memory_space<smem>>
    %170 = vector.broadcast %169 : f32 to vector<16x128xf32>
    %171 = arith.mulf %0, %170 : vector<16x128xf32>
    %172 = arith.addf %168, %171 : vector<16x128xf32>
    %c32 = arith.constant 32 : index
    %173 = memref.load %arg2[%c32] : memref<96xf32, #tpu.memory_space<smem>>
    %174 = vector.broadcast %173 : f32 to vector<16x128xf32>
    %175 = arith.mulf %2, %174 : vector<16x128xf32>
    %176 = arith.addf %172, %175 : vector<16x128xf32>
    %cst_41 = arith.constant 0xFF800000 : f32
    %177 = vector.broadcast %cst_41 : f32 to vector<16x128xf32>
    %178 = arith.select %5, %176, %177 : vector<16x128xi1>, vector<16x128xf32>
    %cst_42 = arith.constant dense<0xFF800000> : vector<16xf32>
    %179 = vector.multi_reduction <maximumf>, %178, %cst_42 [1] : vector<16x128xf32> to vector<16xf32>
    %180 = vector.shape_cast %179 : vector<16xf32> to vector<16x1xf32>
    %c0_43 = arith.constant 0 : index
    %c10_44 = arith.constant 10 : index
    %181 = vector.load %arg9[%c0_43, %c10_44] : memref<16x32xf32, #tpu.memory_space<vmem>>, vector<16x1xf32>
    tpu.vector_store %arg9[%c0_43, %c10_44], %180 {strides = array<i32>} : memref<16x32xf32, #tpu.memory_space<vmem>>, vector<16x1xf32>,
    %c33 = arith.constant 33 : index
    %182 = memref.load %arg2[%c33] : memref<96xf32, #tpu.memory_space<smem>>
    %183 = vector.broadcast %182 : f32 to vector<16x128xf32>
    %184 = arith.mulf %1, %183 : vector<16x128xf32>
    %c34 = arith.constant 34 : index
    %185 = memref.load %arg2[%c34] : memref<96xf32, #tpu.memory_space<smem>>
    %186 = vector.broadcast %185 : f32 to vector<16x128xf32>
    %187 = arith.mulf %0, %186 : vector<16x128xf32>
    %188 = arith.addf %184, %187 : vector<16x128xf32>
    %c35 = arith.constant 35 : index
    %189 = memref.load %arg2[%c35] : memref<96xf32, #tpu.memory_space<smem>>
    %190 = vector.broadcast %189 : f32 to vector<16x128xf32>
    %191 = arith.mulf %2, %190 : vector<16x128xf32>
    %192 = arith.addf %188, %191 : vector<16x128xf32>
    %cst_45 = arith.constant 0xFF800000 : f32
    %193 = vector.broadcast %cst_45 : f32 to vector<16x128xf32>
    %194 = arith.select %5, %192, %193 : vector<16x128xi1>, vector<16x128xf32>
    %cst_46 = arith.constant dense<0xFF800000> : vector<16xf32>
    %195 = vector.multi_reduction <maximumf>, %194, %cst_46 [1] : vector<16x128xf32> to vector<16xf32>
    %196 = vector.shape_cast %195 : vector<16xf32> to vector<16x1xf32>
    %c0_47 = arith.constant 0 : index
    %c11_48 = arith.constant 11 : index
    %197 = vector.load %arg9[%c0_47, %c11_48] : memref<16x32xf32, #tpu.memory_space<vmem>>, vector<16x1xf32>
    tpu.vector_store %arg9[%c0_47, %c11_48], %196 {strides = array<i32>} : memref<16x32xf32, #tpu.memory_space<vmem>>, vector<16x1xf32>,
    %c36 = arith.constant 36 : index
    %198 = memref.load %arg2[%c36] : memref<96xf32, #tpu.memory_space<smem>>
    %199 = vector.broadcast %198 : f32 to vector<16x128xf32>
    %200 = arith.mulf %1, %199 : vector<16x128xf32>
    %c37 = arith.constant 37 : index
    %201 = memref.load %arg2[%c37] : memref<96xf32, #tpu.memory_space<smem>>
    %202 = vector.broadcast %201 : f32 to vector<16x128xf32>
    %203 = arith.mulf %0, %202 : vector<16x128xf32>
    %204 = arith.addf %200, %203 : vector<16x128xf32>
    %c38 = arith.constant 38 : index
    %205 = memref.load %arg2[%c38] : memref<96xf32, #tpu.memory_space<smem>>
    %206 = vector.broadcast %205 : f32 to vector<16x128xf32>
    %207 = arith.mulf %2, %206 : vector<16x128xf32>
    %208 = arith.addf %204, %207 : vector<16x128xf32>
    %cst_49 = arith.constant 0xFF800000 : f32
    %209 = vector.broadcast %cst_49 : f32 to vector<16x128xf32>
    %210 = arith.select %5, %208, %209 : vector<16x128xi1>, vector<16x128xf32>
    %cst_50 = arith.constant dense<0xFF800000> : vector<16xf32>
    %211 = vector.multi_reduction <maximumf>, %210, %cst_50 [1] : vector<16x128xf32> to vector<16xf32>
    %212 = vector.shape_cast %211 : vector<16xf32> to vector<16x1xf32>
    %c0_51 = arith.constant 0 : index
    %c12_52 = arith.constant 12 : index
    %213 = vector.load %arg9[%c0_51, %c12_52] : memref<16x32xf32, #tpu.memory_space<vmem>>, vector<16x1xf32>
    tpu.vector_store %arg9[%c0_51, %c12_52], %212 {strides = array<i32>} : memref<16x32xf32, #tpu.memory_space<vmem>>, vector<16x1xf32>,
    %c39 = arith.constant 39 : index
    %214 = memref.load %arg2[%c39] : memref<96xf32, #tpu.memory_space<smem>>
    %215 = vector.broadcast %214 : f32 to vector<16x128xf32>
    %216 = arith.mulf %1, %215 : vector<16x128xf32>
    %c40 = arith.constant 40 : index
    %217 = memref.load %arg2[%c40] : memref<96xf32, #tpu.memory_space<smem>>
    %218 = vector.broadcast %217 : f32 to vector<16x128xf32>
    %219 = arith.mulf %0, %218 : vector<16x128xf32>
    %220 = arith.addf %216, %219 : vector<16x128xf32>
    %c41 = arith.constant 41 : index
    %221 = memref.load %arg2[%c41] : memref<96xf32, #tpu.memory_space<smem>>
    %222 = vector.broadcast %221 : f32 to vector<16x128xf32>
    %223 = arith.mulf %2, %222 : vector<16x128xf32>
    %224 = arith.addf %220, %223 : vector<16x128xf32>
    %cst_53 = arith.constant 0xFF800000 : f32
    %225 = vector.broadcast %cst_53 : f32 to vector<16x128xf32>
    %226 = arith.select %5, %224, %225 : vector<16x128xi1>, vector<16x128xf32>
    %cst_54 = arith.constant dense<0xFF800000> : vector<16xf32>
    %227 = vector.multi_reduction <maximumf>, %226, %cst_54 [1] : vector<16x128xf32> to vector<16xf32>
    %228 = vector.shape_cast %227 : vector<16xf32> to vector<16x1xf32>
    %c0_55 = arith.constant 0 : index
    %c13_56 = arith.constant 13 : index
    %229 = vector.load %arg9[%c0_55, %c13_56] : memref<16x32xf32, #tpu.memory_space<vmem>>, vector<16x1xf32>
    tpu.vector_store %arg9[%c0_55, %c13_56], %228 {strides = array<i32>} : memref<16x32xf32, #tpu.memory_space<vmem>>, vector<16x1xf32>,
    %c42 = arith.constant 42 : index
    %230 = memref.load %arg2[%c42] : memref<96xf32, #tpu.memory_space<smem>>
    %231 = vector.broadcast %230 : f32 to vector<16x128xf32>
    %232 = arith.mulf %1, %231 : vector<16x128xf32>
    %c43 = arith.constant 43 : index
    %233 = memref.load %arg2[%c43] : memref<96xf32, #tpu.memory_space<smem>>
    %234 = vector.broadcast %233 : f32 to vector<16x128xf32>
    %235 = arith.mulf %0, %234 : vector<16x128xf32>
    %236 = arith.addf %232, %235 : vector<16x128xf32>
    %c44 = arith.constant 44 : index
    %237 = memref.load %arg2[%c44] : memref<96xf32, #tpu.memory_space<smem>>
    %238 = vector.broadcast %237 : f32 to vector<16x128xf32>
    %239 = arith.mulf %2, %238 : vector<16x128xf32>
    %240 = arith.addf %236, %239 : vector<16x128xf32>
    %cst_57 = arith.constant 0xFF800000 : f32
    %241 = vector.broadcast %cst_57 : f32 to vector<16x128xf32>
    %242 = arith.select %5, %240, %241 : vector<16x128xi1>, vector<16x128xf32>
    %cst_58 = arith.constant dense<0xFF800000> : vector<16xf32>
    %243 = vector.multi_reduction <maximumf>, %242, %cst_58 [1] : vector<16x128xf32> to vector<16xf32>
    %244 = vector.shape_cast %243 : vector<16xf32> to vector<16x1xf32>
    %c0_59 = arith.constant 0 : index
    %c14_60 = arith.constant 14 : index
    %245 = vector.load %arg9[%c0_59, %c14_60] : memref<16x32xf32, #tpu.memory_space<vmem>>, vector<16x1xf32>
    tpu.vector_store %arg9[%c0_59, %c14_60], %244 {strides = array<i32>} : memref<16x32xf32, #tpu.memory_space<vmem>>, vector<16x1xf32>,
    %c45 = arith.constant 45 : index
    %246 = memref.load %arg2[%c45] : memref<96xf32, #tpu.memory_space<smem>>
    %247 = vector.broadcast %246 : f32 to vector<16x128xf32>
    %248 = arith.mulf %1, %247 : vector<16x128xf32>
    %c46 = arith.constant 46 : index
    %249 = memref.load %arg2[%c46] : memref<96xf32, #tpu.memory_space<smem>>
    %250 = vector.broadcast %249 : f32 to vector<16x128xf32>
    %251 = arith.mulf %0, %250 : vector<16x128xf32>
    %252 = arith.addf %248, %251 : vector<16x128xf32>
    %c47 = arith.constant 47 : index
    %253 = memref.load %arg2[%c47] : memref<96xf32, #tpu.memory_space<smem>>
    %254 = vector.broadcast %253 : f32 to vector<16x128xf32>
    %255 = arith.mulf %2, %254 : vector<16x128xf32>
    %256 = arith.addf %252, %255 : vector<16x128xf32>
    %cst_61 = arith.constant 0xFF800000 : f32
    %257 = vector.broadcast %cst_61 : f32 to vector<16x128xf32>
    %258 = arith.select %5, %256, %257 : vector<16x128xi1>, vector<16x128xf32>
    %cst_62 = arith.constant dense<0xFF800000> : vector<16xf32>
    %259 = vector.multi_reduction <maximumf>, %258, %cst_62 [1] : vector<16x128xf32> to vector<16xf32>
    %260 = vector.shape_cast %259 : vector<16xf32> to vector<16x1xf32>
    %c0_63 = arith.constant 0 : index
    %c15_64 = arith.constant 15 : index
    %261 = vector.load %arg9[%c0_63, %c15_64] : memref<16x32xf32, #tpu.memory_space<vmem>>, vector<16x1xf32>
    tpu.vector_store %arg9[%c0_63, %c15_64], %260 {strides = array<i32>} : memref<16x32xf32, #tpu.memory_space<vmem>>, vector<16x1xf32>,
    %c48 = arith.constant 48 : index
    %262 = memref.load %arg2[%c48] : memref<96xf32, #tpu.memory_space<smem>>
    %263 = vector.broadcast %262 : f32 to vector<16x128xf32>
    %264 = arith.mulf %1, %263 : vector<16x128xf32>
    %c49 = arith.constant 49 : index
    %265 = memref.load %arg2[%c49] : memref<96xf32, #tpu.memory_space<smem>>
    %266 = vector.broadcast %265 : f32 to vector<16x128xf32>
    %267 = arith.mulf %0, %266 : vector<16x128xf32>
    %268 = arith.addf %264, %267 : vector<16x128xf32>
    %c50 = arith.constant 50 : index
    %269 = memref.load %arg2[%c50] : memref<96xf32, #tpu.memory_space<smem>>
    %270 = vector.broadcast %269 : f32 to vector<16x128xf32>
    %271 = arith.mulf %2, %270 : vector<16x128xf32>
    %272 = arith.addf %268, %271 : vector<16x128xf32>
    %cst_65 = arith.constant 0xFF800000 : f32
    %273 = vector.broadcast %cst_65 : f32 to vector<16x128xf32>
    %274 = arith.select %5, %272, %273 : vector<16x128xi1>, vector<16x128xf32>
    %cst_66 = arith.constant dense<0xFF800000> : vector<16xf32>
    %275 = vector.multi_reduction <maximumf>, %274, %cst_66 [1] : vector<16x128xf32> to vector<16xf32>
    %276 = vector.shape_cast %275 : vector<16xf32> to vector<16x1xf32>
    %c0_67 = arith.constant 0 : index
    %c16_68 = arith.constant 16 : index
    %277 = vector.load %arg9[%c0_67, %c16_68] : memref<16x32xf32, #tpu.memory_space<vmem>>, vector<16x1xf32>
    tpu.vector_store %arg9[%c0_67, %c16_68], %276 {strides = array<i32>} : memref<16x32xf32, #tpu.memory_space<vmem>>, vector<16x1xf32>,
    %c51 = arith.constant 51 : index
    %278 = memref.load %arg2[%c51] : memref<96xf32, #tpu.memory_space<smem>>
    %279 = vector.broadcast %278 : f32 to vector<16x128xf32>
    %280 = arith.mulf %1, %279 : vector<16x128xf32>
    %c52 = arith.constant 52 : index
    %281 = memref.load %arg2[%c52] : memref<96xf32, #tpu.memory_space<smem>>
    %282 = vector.broadcast %281 : f32 to vector<16x128xf32>
    %283 = arith.mulf %0, %282 : vector<16x128xf32>
    %284 = arith.addf %280, %283 : vector<16x128xf32>
    %c53 = arith.constant 53 : index
    %285 = memref.load %arg2[%c53] : memref<96xf32, #tpu.memory_space<smem>>
    %286 = vector.broadcast %285 : f32 to vector<16x128xf32>
    %287 = arith.mulf %2, %286 : vector<16x128xf32>
    %288 = arith.addf %284, %287 : vector<16x128xf32>
    %cst_69 = arith.constant 0xFF800000 : f32
    %289 = vector.broadcast %cst_69 : f32 to vector<16x128xf32>
    %290 = arith.select %5, %288, %289 : vector<16x128xi1>, vector<16x128xf32>
    %cst_70 = arith.constant dense<0xFF800000> : vector<16xf32>
    %291 = vector.multi_reduction <maximumf>, %290, %cst_70 [1] : vector<16x128xf32> to vector<16xf32>
    %292 = vector.shape_cast %291 : vector<16xf32> to vector<16x1xf32>
    %c0_71 = arith.constant 0 : index
    %c17_72 = arith.constant 17 : index
    %293 = vector.load %arg9[%c0_71, %c17_72] : memref<16x32xf32, #tpu.memory_space<vmem>>, vector<16x1xf32>
    tpu.vector_store %arg9[%c0_71, %c17_72], %292 {strides = array<i32>} : memref<16x32xf32, #tpu.memory_space<vmem>>, vector<16x1xf32>,
    %c54 = arith.constant 54 : index
    %294 = memref.load %arg2[%c54] : memref<96xf32, #tpu.memory_space<smem>>
    %295 = vector.broadcast %294 : f32 to vector<16x128xf32>
    %296 = arith.mulf %1, %295 : vector<16x128xf32>
    %c55 = arith.constant 55 : index
    %297 = memref.load %arg2[%c55] : memref<96xf32, #tpu.memory_space<smem>>
    %298 = vector.broadcast %297 : f32 to vector<16x128xf32>
    %299 = arith.mulf %0, %298 : vector<16x128xf32>
    %300 = arith.addf %296, %299 : vector<16x128xf32>
    %c56 = arith.constant 56 : index
    %301 = memref.load %arg2[%c56] : memref<96xf32, #tpu.memory_space<smem>>
    %302 = vector.broadcast %301 : f32 to vector<16x128xf32>
    %303 = arith.mulf %2, %302 : vector<16x128xf32>
    %304 = arith.addf %300, %303 : vector<16x128xf32>
    %cst_73 = arith.constant 0xFF800000 : f32
    %305 = vector.broadcast %cst_73 : f32 to vector<16x128xf32>
    %306 = arith.select %5, %304, %305 : vector<16x128xi1>, vector<16x128xf32>
    %cst_74 = arith.constant dense<0xFF800000> : vector<16xf32>
    %307 = vector.multi_reduction <maximumf>, %306, %cst_74 [1] : vector<16x128xf32> to vector<16xf32>
    %308 = vector.shape_cast %307 : vector<16xf32> to vector<16x1xf32>
    %c0_75 = arith.constant 0 : index
    %c18_76 = arith.constant 18 : index
    %309 = vector.load %arg9[%c0_75, %c18_76] : memref<16x32xf32, #tpu.memory_space<vmem>>, vector<16x1xf32>
    tpu.vector_store %arg9[%c0_75, %c18_76], %308 {strides = array<i32>} : memref<16x32xf32, #tpu.memory_space<vmem>>, vector<16x1xf32>,
    %c57 = arith.constant 57 : index
    %310 = memref.load %arg2[%c57] : memref<96xf32, #tpu.memory_space<smem>>
    %311 = vector.broadcast %310 : f32 to vector<16x128xf32>
    %312 = arith.mulf %1, %311 : vector<16x128xf32>
    %c58 = arith.constant 58 : index
    %313 = memref.load %arg2[%c58] : memref<96xf32, #tpu.memory_space<smem>>
    %314 = vector.broadcast %313 : f32 to vector<16x128xf32>
    %315 = arith.mulf %0, %314 : vector<16x128xf32>
    %316 = arith.addf %312, %315 : vector<16x128xf32>
    %c59 = arith.constant 59 : index
    %317 = memref.load %arg2[%c59] : memref<96xf32, #tpu.memory_space<smem>>
    %318 = vector.broadcast %317 : f32 to vector<16x128xf32>
    %319 = arith.mulf %2, %318 : vector<16x128xf32>
    %320 = arith.addf %316, %319 : vector<16x128xf32>
    %cst_77 = arith.constant 0xFF800000 : f32
    %321 = vector.broadcast %cst_77 : f32 to vector<16x128xf32>
    %322 = arith.select %5, %320, %321 : vector<16x128xi1>, vector<16x128xf32>
    %cst_78 = arith.constant dense<0xFF800000> : vector<16xf32>
    %323 = vector.multi_reduction <maximumf>, %322, %cst_78 [1] : vector<16x128xf32> to vector<16xf32>
    %324 = vector.shape_cast %323 : vector<16xf32> to vector<16x1xf32>
    %c0_79 = arith.constant 0 : index
    %c19_80 = arith.constant 19 : index
    %325 = vector.load %arg9[%c0_79, %c19_80] : memref<16x32xf32, #tpu.memory_space<vmem>>, vector<16x1xf32>
    tpu.vector_store %arg9[%c0_79, %c19_80], %324 {strides = array<i32>} : memref<16x32xf32, #tpu.memory_space<vmem>>, vector<16x1xf32>,
    %c60 = arith.constant 60 : index
    %326 = memref.load %arg2[%c60] : memref<96xf32, #tpu.memory_space<smem>>
    %327 = vector.broadcast %326 : f32 to vector<16x128xf32>
    %328 = arith.mulf %1, %327 : vector<16x128xf32>
    %c61 = arith.constant 61 : index
    %329 = memref.load %arg2[%c61] : memref<96xf32, #tpu.memory_space<smem>>
    %330 = vector.broadcast %329 : f32 to vector<16x128xf32>
    %331 = arith.mulf %0, %330 : vector<16x128xf32>
    %332 = arith.addf %328, %331 : vector<16x128xf32>
    %c62 = arith.constant 62 : index
    %333 = memref.load %arg2[%c62] : memref<96xf32, #tpu.memory_space<smem>>
    %334 = vector.broadcast %333 : f32 to vector<16x128xf32>
    %335 = arith.mulf %2, %334 : vector<16x128xf32>
    %336 = arith.addf %332, %335 : vector<16x128xf32>
    %cst_81 = arith.constant 0xFF800000 : f32
    %337 = vector.broadcast %cst_81 : f32 to vector<16x128xf32>
    %338 = arith.select %5, %336, %337 : vector<16x128xi1>, vector<16x128xf32>
    %cst_82 = arith.constant dense<0xFF800000> : vector<16xf32>
    %339 = vector.multi_reduction <maximumf>, %338, %cst_82 [1] : vector<16x128xf32> to vector<16xf32>
    %340 = vector.shape_cast %339 : vector<16xf32> to vector<16x1xf32>
    %c0_83 = arith.constant 0 : index
    %c20_84 = arith.constant 20 : index
    %341 = vector.load %arg9[%c0_83, %c20_84] : memref<16x32xf32, #tpu.memory_space<vmem>>, vector<16x1xf32>
    tpu.vector_store %arg9[%c0_83, %c20_84], %340 {strides = array<i32>} : memref<16x32xf32, #tpu.memory_space<vmem>>, vector<16x1xf32>,
    %c63 = arith.constant 63 : index
    %342 = memref.load %arg2[%c63] : memref<96xf32, #tpu.memory_space<smem>>
    %343 = vector.broadcast %342 : f32 to vector<16x128xf32>
    %344 = arith.mulf %1, %343 : vector<16x128xf32>
    %c64 = arith.constant 64 : index
    %345 = memref.load %arg2[%c64] : memref<96xf32, #tpu.memory_space<smem>>
    %346 = vector.broadcast %345 : f32 to vector<16x128xf32>
    %347 = arith.mulf %0, %346 : vector<16x128xf32>
    %348 = arith.addf %344, %347 : vector<16x128xf32>
    %c65 = arith.constant 65 : index
    %349 = memref.load %arg2[%c65] : memref<96xf32, #tpu.memory_space<smem>>
    %350 = vector.broadcast %349 : f32 to vector<16x128xf32>
    %351 = arith.mulf %2, %350 : vector<16x128xf32>
    %352 = arith.addf %348, %351 : vector<16x128xf32>
    %cst_85 = arith.constant 0xFF800000 : f32
    %353 = vector.broadcast %cst_85 : f32 to vector<16x128xf32>
    %354 = arith.select %5, %352, %353 : vector<16x128xi1>, vector<16x128xf32>
    %cst_86 = arith.constant dense<0xFF800000> : vector<16xf32>
    %355 = vector.multi_reduction <maximumf>, %354, %cst_86 [1] : vector<16x128xf32> to vector<16xf32>
    %356 = vector.shape_cast %355 : vector<16xf32> to vector<16x1xf32>
    %c0_87 = arith.constant 0 : index
    %c21_88 = arith.constant 21 : index
    %357 = vector.load %arg9[%c0_87, %c21_88] : memref<16x32xf32, #tpu.memory_space<vmem>>, vector<16x1xf32>
    tpu.vector_store %arg9[%c0_87, %c21_88], %356 {strides = array<i32>} : memref<16x32xf32, #tpu.memory_space<vmem>>, vector<16x1xf32>,
    %c66 = arith.constant 66 : index
    %358 = memref.load %arg2[%c66] : memref<96xf32, #tpu.memory_space<smem>>
    %359 = vector.broadcast %358 : f32 to vector<16x128xf32>
    %360 = arith.mulf %1, %359 : vector<16x128xf32>
    %c67 = arith.constant 67 : index
    %361 = memref.load %arg2[%c67] : memref<96xf32, #tpu.memory_space<smem>>
    %362 = vector.broadcast %361 : f32 to vector<16x128xf32>
    %363 = arith.mulf %0, %362 : vector<16x128xf32>
    %364 = arith.addf %360, %363 : vector<16x128xf32>
    %c68 = arith.constant 68 : index
    %365 = memref.load %arg2[%c68] : memref<96xf32, #tpu.memory_space<smem>>
    %366 = vector.broadcast %365 : f32 to vector<16x128xf32>
    %367 = arith.mulf %2, %366 : vector<16x128xf32>
    %368 = arith.addf %364, %367 : vector<16x128xf32>
    %cst_89 = arith.constant 0xFF800000 : f32
    %369 = vector.broadcast %cst_89 : f32 to vector<16x128xf32>
    %370 = arith.select %5, %368, %369 : vector<16x128xi1>, vector<16x128xf32>
    %cst_90 = arith.constant dense<0xFF800000> : vector<16xf32>
    %371 = vector.multi_reduction <maximumf>, %370, %cst_90 [1] : vector<16x128xf32> to vector<16xf32>
    %372 = vector.shape_cast %371 : vector<16xf32> to vector<16x1xf32>
    %c0_91 = arith.constant 0 : index
    %c22_92 = arith.constant 22 : index
    %373 = vector.load %arg9[%c0_91, %c22_92] : memref<16x32xf32, #tpu.memory_space<vmem>>, vector<16x1xf32>
    tpu.vector_store %arg9[%c0_91, %c22_92], %372 {strides = array<i32>} : memref<16x32xf32, #tpu.memory_space<vmem>>, vector<16x1xf32>,
    %c69 = arith.constant 69 : index
    %374 = memref.load %arg2[%c69] : memref<96xf32, #tpu.memory_space<smem>>
    %375 = vector.broadcast %374 : f32 to vector<16x128xf32>
    %376 = arith.mulf %1, %375 : vector<16x128xf32>
    %c70 = arith.constant 70 : index
    %377 = memref.load %arg2[%c70] : memref<96xf32, #tpu.memory_space<smem>>
    %378 = vector.broadcast %377 : f32 to vector<16x128xf32>
    %379 = arith.mulf %0, %378 : vector<16x128xf32>
    %380 = arith.addf %376, %379 : vector<16x128xf32>
    %c71 = arith.constant 71 : index
    %381 = memref.load %arg2[%c71] : memref<96xf32, #tpu.memory_space<smem>>
    %382 = vector.broadcast %381 : f32 to vector<16x128xf32>
    %383 = arith.mulf %2, %382 : vector<16x128xf32>
    %384 = arith.addf %380, %383 : vector<16x128xf32>
    %cst_93 = arith.constant 0xFF800000 : f32
    %385 = vector.broadcast %cst_93 : f32 to vector<16x128xf32>
    %386 = arith.select %5, %384, %385 : vector<16x128xi1>, vector<16x128xf32>
    %cst_94 = arith.constant dense<0xFF800000> : vector<16xf32>
    %387 = vector.multi_reduction <maximumf>, %386, %cst_94 [1] : vector<16x128xf32> to vector<16xf32>
    %388 = vector.shape_cast %387 : vector<16xf32> to vector<16x1xf32>
    %c0_95 = arith.constant 0 : index
    %c23_96 = arith.constant 23 : index
    %389 = vector.load %arg9[%c0_95, %c23_96] : memref<16x32xf32, #tpu.memory_space<vmem>>, vector<16x1xf32>
    tpu.vector_store %arg9[%c0_95, %c23_96], %388 {strides = array<i32>} : memref<16x32xf32, #tpu.memory_space<vmem>>, vector<16x1xf32>,
    %c72 = arith.constant 72 : index
    %390 = memref.load %arg2[%c72] : memref<96xf32, #tpu.memory_space<smem>>
    %391 = vector.broadcast %390 : f32 to vector<16x128xf32>
    %392 = arith.mulf %1, %391 : vector<16x128xf32>
    %c73 = arith.constant 73 : index
    %393 = memref.load %arg2[%c73] : memref<96xf32, #tpu.memory_space<smem>>
    %394 = vector.broadcast %393 : f32 to vector<16x128xf32>
    %395 = arith.mulf %0, %394 : vector<16x128xf32>
    %396 = arith.addf %392, %395 : vector<16x128xf32>
    %c74 = arith.constant 74 : index
    %397 = memref.load %arg2[%c74] : memref<96xf32, #tpu.memory_space<smem>>
    %398 = vector.broadcast %397 : f32 to vector<16x128xf32>
    %399 = arith.mulf %2, %398 : vector<16x128xf32>
    %400 = arith.addf %396, %399 : vector<16x128xf32>
    %cst_97 = arith.constant 0xFF800000 : f32
    %401 = vector.broadcast %cst_97 : f32 to vector<16x128xf32>
    %402 = arith.select %5, %400, %401 : vector<16x128xi1>, vector<16x128xf32>
    %cst_98 = arith.constant dense<0xFF800000> : vector<16xf32>
    %403 = vector.multi_reduction <maximumf>, %402, %cst_98 [1] : vector<16x128xf32> to vector<16xf32>
    %404 = vector.shape_cast %403 : vector<16xf32> to vector<16x1xf32>
    %c0_99 = arith.constant 0 : index
    %c24_100 = arith.constant 24 : index
    %405 = vector.load %arg9[%c0_99, %c24_100] : memref<16x32xf32, #tpu.memory_space<vmem>>, vector<16x1xf32>
    tpu.vector_store %arg9[%c0_99, %c24_100], %404 {strides = array<i32>} : memref<16x32xf32, #tpu.memory_space<vmem>>, vector<16x1xf32>,
    %c75 = arith.constant 75 : index
    %406 = memref.load %arg2[%c75] : memref<96xf32, #tpu.memory_space<smem>>
    %407 = vector.broadcast %406 : f32 to vector<16x128xf32>
    %408 = arith.mulf %1, %407 : vector<16x128xf32>
    %c76 = arith.constant 76 : index
    %409 = memref.load %arg2[%c76] : memref<96xf32, #tpu.memory_space<smem>>
    %410 = vector.broadcast %409 : f32 to vector<16x128xf32>
    %411 = arith.mulf %0, %410 : vector<16x128xf32>
    %412 = arith.addf %408, %411 : vector<16x128xf32>
    %c77 = arith.constant 77 : index
    %413 = memref.load %arg2[%c77] : memref<96xf32, #tpu.memory_space<smem>>
    %414 = vector.broadcast %413 : f32 to vector<16x128xf32>
    %415 = arith.mulf %2, %414 : vector<16x128xf32>
    %416 = arith.addf %412, %415 : vector<16x128xf32>
    %cst_101 = arith.constant 0xFF800000 : f32
    %417 = vector.broadcast %cst_101 : f32 to vector<16x128xf32>
    %418 = arith.select %5, %416, %417 : vector<16x128xi1>, vector<16x128xf32>
    %cst_102 = arith.constant dense<0xFF800000> : vector<16xf32>
    %419 = vector.multi_reduction <maximumf>, %418, %cst_102 [1] : vector<16x128xf32> to vector<16xf32>
    %420 = vector.shape_cast %419 : vector<16xf32> to vector<16x1xf32>
    %c0_103 = arith.constant 0 : index
    %c25_104 = arith.constant 25 : index
    %421 = vector.load %arg9[%c0_103, %c25_104] : memref<16x32xf32, #tpu.memory_space<vmem>>, vector<16x1xf32>
    tpu.vector_store %arg9[%c0_103, %c25_104], %420 {strides = array<i32>} : memref<16x32xf32, #tpu.memory_space<vmem>>, vector<16x1xf32>,
    %c78 = arith.constant 78 : index
    %422 = memref.load %arg2[%c78] : memref<96xf32, #tpu.memory_space<smem>>
    %423 = vector.broadcast %422 : f32 to vector<16x128xf32>
    %424 = arith.mulf %1, %423 : vector<16x128xf32>
    %c79 = arith.constant 79 : index
    %425 = memref.load %arg2[%c79] : memref<96xf32, #tpu.memory_space<smem>>
    %426 = vector.broadcast %425 : f32 to vector<16x128xf32>
    %427 = arith.mulf %0, %426 : vector<16x128xf32>
    %428 = arith.addf %424, %427 : vector<16x128xf32>
    %c80 = arith.constant 80 : index
    %429 = memref.load %arg2[%c80] : memref<96xf32, #tpu.memory_space<smem>>
    %430 = vector.broadcast %429 : f32 to vector<16x128xf32>
    %431 = arith.mulf %2, %430 : vector<16x128xf32>
    %432 = arith.addf %428, %431 : vector<16x128xf32>
    %cst_105 = arith.constant 0xFF800000 : f32
    %433 = vector.broadcast %cst_105 : f32 to vector<16x128xf32>
    %434 = arith.select %5, %432, %433 : vector<16x128xi1>, vector<16x128xf32>
    %cst_106 = arith.constant dense<0xFF800000> : vector<16xf32>
    %435 = vector.multi_reduction <maximumf>, %434, %cst_106 [1] : vector<16x128xf32> to vector<16xf32>
    %436 = vector.shape_cast %435 : vector<16xf32> to vector<16x1xf32>
    %c0_107 = arith.constant 0 : index
    %c26_108 = arith.constant 26 : index
    %437 = vector.load %arg9[%c0_107, %c26_108] : memref<16x32xf32, #tpu.memory_space<vmem>>, vector<16x1xf32>
    tpu.vector_store %arg9[%c0_107, %c26_108], %436 {strides = array<i32>} : memref<16x32xf32, #tpu.memory_space<vmem>>, vector<16x1xf32>,
    %c81 = arith.constant 81 : index
    %438 = memref.load %arg2[%c81] : memref<96xf32, #tpu.memory_space<smem>>
    %439 = vector.broadcast %438 : f32 to vector<16x128xf32>
    %440 = arith.mulf %1, %439 : vector<16x128xf32>
    %c82 = arith.constant 82 : index
    %441 = memref.load %arg2[%c82] : memref<96xf32, #tpu.memory_space<smem>>
    %442 = vector.broadcast %441 : f32 to vector<16x128xf32>
    %443 = arith.mulf %0, %442 : vector<16x128xf32>
    %444 = arith.addf %440, %443 : vector<16x128xf32>
    %c83 = arith.constant 83 : index
    %445 = memref.load %arg2[%c83] : memref<96xf32, #tpu.memory_space<smem>>
    %446 = vector.broadcast %445 : f32 to vector<16x128xf32>
    %447 = arith.mulf %2, %446 : vector<16x128xf32>
    %448 = arith.addf %444, %447 : vector<16x128xf32>
    %cst_109 = arith.constant 0xFF800000 : f32
    %449 = vector.broadcast %cst_109 : f32 to vector<16x128xf32>
    %450 = arith.select %5, %448, %449 : vector<16x128xi1>, vector<16x128xf32>
    %cst_110 = arith.constant dense<0xFF800000> : vector<16xf32>
    %451 = vector.multi_reduction <maximumf>, %450, %cst_110 [1] : vector<16x128xf32> to vector<16xf32>
    %452 = vector.shape_cast %451 : vector<16xf32> to vector<16x1xf32>
    %c0_111 = arith.constant 0 : index
    %c27_112 = arith.constant 27 : index
    %453 = vector.load %arg9[%c0_111, %c27_112] : memref<16x32xf32, #tpu.memory_space<vmem>>, vector<16x1xf32>
    tpu.vector_store %arg9[%c0_111, %c27_112], %452 {strides = array<i32>} : memref<16x32xf32, #tpu.memory_space<vmem>>, vector<16x1xf32>,
    %c84 = arith.constant 84 : index
    %454 = memref.load %arg2[%c84] : memref<96xf32, #tpu.memory_space<smem>>
    %455 = vector.broadcast %454 : f32 to vector<16x128xf32>
    %456 = arith.mulf %1, %455 : vector<16x128xf32>
    %c85 = arith.constant 85 : index
    %457 = memref.load %arg2[%c85] : memref<96xf32, #tpu.memory_space<smem>>
    %458 = vector.broadcast %457 : f32 to vector<16x128xf32>
    %459 = arith.mulf %0, %458 : vector<16x128xf32>
    %460 = arith.addf %456, %459 : vector<16x128xf32>
    %c86 = arith.constant 86 : index
    %461 = memref.load %arg2[%c86] : memref<96xf32, #tpu.memory_space<smem>>
    %462 = vector.broadcast %461 : f32 to vector<16x128xf32>
    %463 = arith.mulf %2, %462 : vector<16x128xf32>
    %464 = arith.addf %460, %463 : vector<16x128xf32>
    %cst_113 = arith.constant 0xFF800000 : f32
    %465 = vector.broadcast %cst_113 : f32 to vector<16x128xf32>
    %466 = arith.select %5, %464, %465 : vector<16x128xi1>, vector<16x128xf32>
    %cst_114 = arith.constant dense<0xFF800000> : vector<16xf32>
    %467 = vector.multi_reduction <maximumf>, %466, %cst_114 [1] : vector<16x128xf32> to vector<16xf32>
    %468 = vector.shape_cast %467 : vector<16xf32> to vector<16x1xf32>
    %c0_115 = arith.constant 0 : index
    %c28_116 = arith.constant 28 : index
    %469 = vector.load %arg9[%c0_115, %c28_116] : memref<16x32xf32, #tpu.memory_space<vmem>>, vector<16x1xf32>
    tpu.vector_store %arg9[%c0_115, %c28_116], %468 {strides = array<i32>} : memref<16x32xf32, #tpu.memory_space<vmem>>, vector<16x1xf32>,
    %c87 = arith.constant 87 : index
    %470 = memref.load %arg2[%c87] : memref<96xf32, #tpu.memory_space<smem>>
    %471 = vector.broadcast %470 : f32 to vector<16x128xf32>
    %472 = arith.mulf %1, %471 : vector<16x128xf32>
    %c88 = arith.constant 88 : index
    %473 = memref.load %arg2[%c88] : memref<96xf32, #tpu.memory_space<smem>>
    %474 = vector.broadcast %473 : f32 to vector<16x128xf32>
    %475 = arith.mulf %0, %474 : vector<16x128xf32>
    %476 = arith.addf %472, %475 : vector<16x128xf32>
    %c89 = arith.constant 89 : index
    %477 = memref.load %arg2[%c89] : memref<96xf32, #tpu.memory_space<smem>>
    %478 = vector.broadcast %477 : f32 to vector<16x128xf32>
    %479 = arith.mulf %2, %478 : vector<16x128xf32>
    %480 = arith.addf %476, %479 : vector<16x128xf32>
    %cst_117 = arith.constant 0xFF800000 : f32
    %481 = vector.broadcast %cst_117 : f32 to vector<16x128xf32>
    %482 = arith.select %5, %480, %481 : vector<16x128xi1>, vector<16x128xf32>
    %cst_118 = arith.constant dense<0xFF800000> : vector<16xf32>
    %483 = vector.multi_reduction <maximumf>, %482, %cst_118 [1] : vector<16x128xf32> to vector<16xf32>
    %484 = vector.shape_cast %483 : vector<16xf32> to vector<16x1xf32>
    %c0_119 = arith.constant 0 : index
    %c29_120 = arith.constant 29 : index
    %485 = vector.load %arg9[%c0_119, %c29_120] : memref<16x32xf32, #tpu.memory_space<vmem>>, vector<16x1xf32>
    tpu.vector_store %arg9[%c0_119, %c29_120], %484 {strides = array<i32>} : memref<16x32xf32, #tpu.memory_space<vmem>>, vector<16x1xf32>,
    %c90 = arith.constant 90 : index
    %486 = memref.load %arg2[%c90] : memref<96xf32, #tpu.memory_space<smem>>
    %487 = vector.broadcast %486 : f32 to vector<16x128xf32>
    %488 = arith.mulf %1, %487 : vector<16x128xf32>
    %c91 = arith.constant 91 : index
    %489 = memref.load %arg2[%c91] : memref<96xf32, #tpu.memory_space<smem>>
    %490 = vector.broadcast %489 : f32 to vector<16x128xf32>
    %491 = arith.mulf %0, %490 : vector<16x128xf32>
    %492 = arith.addf %488, %491 : vector<16x128xf32>
    %c92 = arith.constant 92 : index
    %493 = memref.load %arg2[%c92] : memref<96xf32, #tpu.memory_space<smem>>
    %494 = vector.broadcast %493 : f32 to vector<16x128xf32>
    %495 = arith.mulf %2, %494 : vector<16x128xf32>
    %496 = arith.addf %492, %495 : vector<16x128xf32>
    %cst_121 = arith.constant 0xFF800000 : f32
    %497 = vector.broadcast %cst_121 : f32 to vector<16x128xf32>
    %498 = arith.select %5, %496, %497 : vector<16x128xi1>, vector<16x128xf32>
    %cst_122 = arith.constant dense<0xFF800000> : vector<16xf32>
    %499 = vector.multi_reduction <maximumf>, %498, %cst_122 [1] : vector<16x128xf32> to vector<16xf32>
    %500 = vector.shape_cast %499 : vector<16xf32> to vector<16x1xf32>
    %c0_123 = arith.constant 0 : index
    %c30_124 = arith.constant 30 : index
    %501 = vector.load %arg9[%c0_123, %c30_124] : memref<16x32xf32, #tpu.memory_space<vmem>>, vector<16x1xf32>
    tpu.vector_store %arg9[%c0_123, %c30_124], %500 {strides = array<i32>} : memref<16x32xf32, #tpu.memory_space<vmem>>, vector<16x1xf32>,
    %c93 = arith.constant 93 : index
    %502 = memref.load %arg2[%c93] : memref<96xf32, #tpu.memory_space<smem>>
    %503 = vector.broadcast %502 : f32 to vector<16x128xf32>
    %504 = arith.mulf %1, %503 : vector<16x128xf32>
    %c94 = arith.constant 94 : index
    %505 = memref.load %arg2[%c94] : memref<96xf32, #tpu.memory_space<smem>>
    %506 = vector.broadcast %505 : f32 to vector<16x128xf32>
    %507 = arith.mulf %0, %506 : vector<16x128xf32>
    %508 = arith.addf %504, %507 : vector<16x128xf32>
    %c95 = arith.constant 95 : index
    %509 = memref.load %arg2[%c95] : memref<96xf32, #tpu.memory_space<smem>>
    %510 = vector.broadcast %509 : f32 to vector<16x128xf32>
    %511 = arith.mulf %2, %510 : vector<16x128xf32>
    %512 = arith.addf %508, %511 : vector<16x128xf32>
    %cst_125 = arith.constant 0xFF800000 : f32
    %513 = vector.broadcast %cst_125 : f32 to vector<16x128xf32>
    %514 = arith.select %5, %512, %513 : vector<16x128xi1>, vector<16x128xf32>
    %cst_126 = arith.constant dense<0xFF800000> : vector<16xf32>
    %515 = vector.multi_reduction <maximumf>, %514, %cst_126 [1] : vector<16x128xf32> to vector<16xf32>
    %516 = vector.shape_cast %515 : vector<16xf32> to vector<16x1xf32>
    %c0_127 = arith.constant 0 : index
    %c31_128 = arith.constant 31 : index
    %517 = vector.load %arg9[%c0_127, %c31_128] : memref<16x32xf32, #tpu.memory_space<vmem>>, vector<16x1xf32>
    tpu.vector_store %arg9[%c0_127, %c31_128], %516 {strides = array<i32>} : memref<16x32xf32, #tpu.memory_space<vmem>>, vector<16x1xf32>,
    %c0_129 = arith.constant 0 : index
    %c0_130 = arith.constant 0 : index
    %518 = vector.load %arg9[%c0_129, %c0_130] : memref<16x32xf32, #tpu.memory_space<vmem>>, vector<16x32xf32>
    %c0_131 = arith.constant 0 : index
    %c0_132 = arith.constant 0 : index
    %519 = vector.load %arg3[%c0_131, %c0_132] : memref<1x32xf32, #tpu.memory_space<vmem>>, vector<1x32xf32>
    %520 = vector.broadcast %519 : vector<1x32xf32> to vector<16x32xf32>
    %521 = arith.addf %518, %520 : vector<16x32xf32>
    %cst_133 = arith.constant 0.000000e+00 : f32
    %522 = vector.broadcast %cst_133 : f32 to vector<16x32xf32>
    %523 = arith.maximumf %521, %522 : vector<16x32xf32>
    %c0_134 = arith.constant 0 : index
    %c0_135 = arith.constant 0 : index
    %524 = vector.load %arg4[%c0_134, %c0_135] : memref<32x32xf32, #tpu.memory_space<vmem>>, vector<32x32xf32>
    %cst_136 = arith.constant dense<0.000000e+00> : vector<16x32xf32>
    %525 = tpu.matmul %523, %524, %cst_136 {dimension_numbers = #tpu.dot_dimension_numbers<[1], [0], [0], [1], [0, 0, 1, 1], [], []>} : vector<16x32xf32>, vector<32x32xf32>, vector<16x32xf32> -> vector<16x32xf32>
    %c0_137 = arith.constant 0 : index
    %c0_138 = arith.constant 0 : index
    %526 = vector.load %arg5[%c0_137, %c0_138] : memref<1x32xf32, #tpu.memory_space<vmem>>, vector<1x32xf32>
    %527 = vector.broadcast %526 : vector<1x32xf32> to vector<16x32xf32>
    %528 = arith.addf %525, %527 : vector<16x32xf32>
    %cst_139 = arith.constant 0.000000e+00 : f32
    %529 = vector.broadcast %cst_139 : f32 to vector<16x32xf32>
    %530 = arith.maximumf %528, %529 : vector<16x32xf32>
    %c0_140 = arith.constant 0 : index
    %c0_141 = arith.constant 0 : index
    %531 = vector.load %arg6[%c0_140, %c0_141] : memref<1x32xf32, #tpu.memory_space<vmem>>, vector<1x32xf32>
    %532 = vector.broadcast %531 : vector<1x32xf32> to vector<16x32xf32>
    %533 = arith.mulf %530, %532 : vector<16x32xf32>
    %cst_142 = arith.constant dense<0.000000e+00> : vector<16xf32>
    %534 = vector.multi_reduction <add>, %533, %cst_142 [1] : vector<16x32xf32> to vector<16xf32>
    %535 = vector.shape_cast %534 : vector<16xf32> to vector<16x1xf32>
    %c0_143 = arith.constant 0 : index
    %c0_144 = arith.constant 0 : index
    %536 = vector.load %arg7[%c0_143, %c0_144] : memref<1x1xf32, #tpu.memory_space<vmem>>, vector<1x1xf32>
    %537 = vector.broadcast %536 : vector<1x1xf32> to vector<16x1xf32>
    %538 = arith.addf %535, %537 : vector<16x1xf32>
    %539 = arith.negf %538 : vector<16x1xf32>
    %540 = math.exp %539 : vector<16x1xf32>
    %cst_145 = arith.constant 1.000000e+00 : f32
    %541 = vector.broadcast %cst_145 : f32 to vector<16x1xf32>
    %542 = arith.addf %541, %540 : vector<16x1xf32>
    %543 = arith.divf %541, %542 : vector<16x1xf32>
    %544 = vector.shape_cast %543 : vector<16x1xf32> to vector<16x1xf32>
    %545 = vector.broadcast %544 : vector<16x1xf32> to vector<16x128xf32>
    %c0_146 = arith.constant 0 : index
    %c0_147 = arith.constant 0 : index
    %546 = vector.load %arg8[%c0_146, %c0_147] : memref<16x128xf32, #tpu.memory_space<vmem>>, vector<16x128xf32>
    tpu.vector_store %arg8[%c0_146, %c0_147], %545 {strides = array<i32>} : memref<16x128xf32, #tpu.memory_space<vmem>>, vector<16x128xf32>,
    return
  }
  func.func @transform_0(%arg0: i32) -> (i32, i32) {
    %c0_i32 = arith.constant 0 : i32
    %c0_i32_0 = arith.constant 0 : i32
    return %arg0, %c0_i32 : i32, i32
  }
  func.func @transform_1(%arg0: i32) -> i32 {
    %c0_i32 = arith.constant 0 : i32
    %c0_i32_0 = arith.constant 0 : i32
    return %c0_i32 : i32
  }
  func.func @transform_2(%arg0: i32) -> (i32, i32) {
    %c0_i32 = arith.constant 0 : i32
    %c0_i32_0 = arith.constant 0 : i32
    %c0_i32_1 = arith.constant 0 : i32
    return %c0_i32, %c0_i32_0 : i32, i32
  }
  func.func @transform_3(%arg0: i32) -> (i32, i32) {
    %c0_i32 = arith.constant 0 : i32
    %c0_i32_0 = arith.constant 0 : i32
    %c0_i32_1 = arith.constant 0 : i32
    return %c0_i32, %c0_i32_0 : i32, i32
  }
  func.func @transform_4(%arg0: i32) -> (i32, i32) {
    %c0_i32 = arith.constant 0 : i32
    %c0_i32_0 = arith.constant 0 : i32
    %c0_i32_1 = arith.constant 0 : i32
    return %c0_i32, %c0_i32_0 : i32, i32
  }
  func.func @transform_5(%arg0: i32) -> (i32, i32) {
    %c0_i32 = arith.constant 0 : i32
    %c0_i32_0 = arith.constant 0 : i32
    %c0_i32_1 = arith.constant 0 : i32
    return %c0_i32, %c0_i32_0 : i32, i32
  }
  func.func @transform_6(%arg0: i32) -> (i32, i32) {
    %c0_i32 = arith.constant 0 : i32
    %c0_i32_0 = arith.constant 0 : i32
    %c0_i32_1 = arith.constant 0 : i32
    return %c0_i32, %c0_i32_0 : i32, i32
  }
  func.func @transform_7(%arg0: i32) -> (i32, i32) {
    %c0_i32 = arith.constant 0 : i32
    %c0_i32_0 = arith.constant 0 : i32
    return %arg0, %c0_i32 : i32, i32
  }
}

</mosaic_0001>

<llo_original>
// kernel: tpu_custom_call.1
$region0: #{tpu_custom_call.1}
  #allocation0 [shape = 'u32[]', space=smem, size = 0x4, offset = 0x4, fixed_abs, tag = 'smem constant byte address 0x4 - core index']
  #allocation1 [shape = 'u32[144,128]{1,0:T(1,128)}', space=vmem, size = 0x12000, scoped, tag = 'internal scratch']
  #allocation2 [shape = 'f32[16,32]{1,0:T(8,128)}', space=vmem, size = 0x2000, scoped, tag = 'scratch operand']
  #allocation3 [shape = 'f32[1,1]{1,0:T(1,128)S(1)}', space=vmem, size = 0x200, scoped, tag = 'scoped memory for tpu_custom_call.1']
  %s0 = inlined_call_operand.hbm [shape: f32[16,128], index: 0, kind: input, shape index: {}]
  %s1 = inlined_call_operand.vmem [shape: f32[96], index: 1, kind: input, shape index: {}]
  %s2 = inlined_call_operand.vmem [shape: f32[1,32], index: 2, kind: input, shape index: {}]
  %s3 = inlined_call_operand.hbm [shape: f32[32,32], index: 3, kind: input, shape index: {}]
  %s4 = inlined_call_operand.vmem [shape: f32[1,32], index: 4, kind: input, shape index: {}]
  %s5 = inlined_call_operand.vmem [shape: f32[1,32], index: 5, kind: input, shape index: {}]
  %s6 = inlined_call_operand.<no memory space> [shape: f32[1,1], index: 6, kind: input, shape index: {}]
  %s7 = inlined_call_operand.hbm [shape: f32[16,128], index: 7, kind: output, shape index: {}]
  %s8 = sld [smem:[#allocation0]]
  $region50: #{tpu_custom_call.1} parent=0
    _
  %s10 = ssub.s32 1, %s8
  %s11 = scalar_select 0, %s10, %s8
  %v12 = vstv %s6
  %13 = vst [vmem:[#allocation3] sm:$0x1] %v12
  $region1: #{tpu_custom_call.1} parent=0
    #allocation4 [shape = 'u8[8192]{0}', space=vmem, size = 0x2000, scoped, tag = 'input window, operand 0, single buffered']
    #allocation5 [shape = 's32[1]{0}', space=sflag, size = 0x4, scoped, tag = 'scoped memory for tpu_custom_call.1']
    #allocation6 [shape = 's32[1]{0}', space=sflag, size = 0x4, scoped, tag = 'scoped memory for tpu_custom_call.1']
    #allocation7 [shape = 's32[1]{0}', space=sflag, size = 0x4, scoped, tag = 'scoped memory for tpu_custom_call.1']
    #allocation8 [shape = 'u8[512]{0}', space=smem, size = 0x200, scoped, tag = 'input window, operand 1, single buffered']
    #allocation9 [shape = 'u8[16384]{0}', space=vmem, size = 0x4000, scoped, tag = 'input window, operand 3, single buffered']
    #allocation10 [shape = 's32[1]{0}', space=sflag, size = 0x4, scoped, tag = 'scoped memory for tpu_custom_call.1']
    #allocation11 [shape = 'u8[8192]{0}', space=vmem, size = 0x2000, scoped, tag = 'output window, operand 0, single buffered']
    %14 = vsyncpa [#allocation5], 0
    %15 = vsyncpa [#allocation7], 0
    %16 = vsyncpa [#allocation10], 0
    %17 = vsyncpa [#allocation6], 0
    // Predicated region
    $region2: #{tpu_custom_call.1} parent=1 // pred_check
      _
    $region3: #{tpu_custom_call.1} parent=1 // pred_check_branch
      %19 = sbr.rel (0) target = $region5
    $region4: #{tpu_custom_call.1} parent=1 // pred_region
      %s21 = ssub.s32 256, 256
      %22 = vsyncadd [#allocation5], %s21
      %s23 = sshll.u32 [#allocation4], 4
      %s24 = int_to_ptr.vmem [resolvable:$true] %s23
      %29 = dma.hbm_to_vmem [thread:$0]  %s0, 256, %s24, [#allocation5], 128, 128, 8
    $region5: #{tpu_custom_call.1} parent=1 // pred_fallthru
      _
    // Predicated region
    $region6: #{tpu_custom_call.1} parent=1 // pred_check
      _
    $region7: #{tpu_custom_call.1} parent=1 // pred_check_branch
      %31 = sbr.rel (0) target = $region9
    $region8: #{tpu_custom_call.1} parent=1 // pred_region
      %s33 = ssub.s32 16, 16
      %34 = vsyncadd [#allocation7], %s33
      %s36 = sshll.u32 %s1, 4
      %s37 = int_to_ptr.vmem [resolvable:$true] %s36
      %39 = dma.vmem_to_smem %s37, 16, [#allocation8], [#allocation7]
    $region9: #{tpu_custom_call.1} parent=1 // pred_fallthru
      _
    // Predicated region
    $region10: #{tpu_custom_call.1} parent=1 // pred_check
      _
    $region11: #{tpu_custom_call.1} parent=1 // pred_check_branch
      %41 = sbr.rel (0) target = $region13
    $region12: #{tpu_custom_call.1} parent=1 // pred_region
      _
    $region13: #{tpu_custom_call.1} parent=1 // pred_fallthru
      _
    // Predicated region
    $region14: #{tpu_custom_call.1} parent=1 // pred_check
      _
    $region15: #{tpu_custom_call.1} parent=1 // pred_check_branch
      %43 = sbr.rel (0) target = $region17
    $region16: #{tpu_custom_call.1} parent=1 // pred_region
      %s45 = ssub.s32 512, 512
      %46 = vsyncadd [#allocation10], %s45
      %s47 = sshll.u32 [#allocation9], 4
      %s48 = int_to_ptr.vmem [resolvable:$true] %s47
      %53 = dma.hbm_to_vmem [thread:$0]  %s3, 512, %s48, [#allocation10], 128, 128, 8
    $region17: #{tpu_custom_call.1} parent=1 // pred_fallthru
      _
    // Predicated region
    $region18: #{tpu_custom_call.1} parent=1 // pred_check
      _
    $region19: #{tpu_custom_call.1} parent=1 // pred_check_branch
      %55 = sbr.rel (0) target = $region21
    $region20: #{tpu_custom_call.1} parent=1 // pred_region
      _
    $region21: #{tpu_custom_call.1} parent=1 // pred_fallthru
      _
    // Predicated region
    $region22: #{tpu_custom_call.1} parent=1 // pred_check
      _
    $region23: #{tpu_custom_call.1} parent=1 // pred_check_branch
      %57 = sbr.rel (0) target = $region25
    $region24: #{tpu_custom_call.1} parent=1 // pred_region
      _
    $region25: #{tpu_custom_call.1} parent=1 // pred_fallthru
      _
    // Predicated region
    $region26: #{tpu_custom_call.1} parent=1 // pred_check
      _
    $region27: #{tpu_custom_call.1} parent=1 // pred_check_branch
      %59 = sbr.rel (0) target = $region29
    $region28: #{tpu_custom_call.1} parent=1 // pred_region
      _
    $region29: #{tpu_custom_call.1} parent=1 // pred_fallthru
      _
    // Predicated region
    $region30: #{tpu_custom_call.1} parent=1 // pred_check
      _
    $region31: #{tpu_custom_call.1} parent=1 // pred_check_branch
      %61 = sbr.rel (0) target = $region33
    $region32: #{tpu_custom_call.1} parent=1 // pred_region
      %62 = dma.done [#allocation5], 256
    $region33: #{tpu_custom_call.1} parent=1 // pred_fallthru
      _
    // Predicated region
    $region34: #{tpu_custom_call.1} parent=1 // pred_check
      _
    $region35: #{tpu_custom_call.1} parent=1 // pred_check_branch
      %64 = sbr.rel (0) target = $region37
    $region36: #{tpu_custom_call.1} parent=1 // pred_region
      %65 = dma.done [#allocation7], 16
    $region37: #{tpu_custom_call.1} parent=1 // pred_fallthru
      _
    // Predicated region
    $region38: #{tpu_custom_call.1} parent=1 // pred_check
      _
    $region39: #{tpu_custom_call.1} parent=1 // pred_check_branch
      %67 = sbr.rel (0) target = $region41
    $region40: #{tpu_custom_call.1} parent=1 // pred_region
      %68 = dma.done [#allocation10], 512
    $region41: #{tpu_custom_call.1} parent=1 // pred_fallthru
      _
    %69 = sfence
    %v70 = vld [vmem:[#allocation4] sm:$0xff]
    %v71 = vld [vmem:[#allocation4 + $0x8] sm:$0xff]
    %72 = vrot.lane.b32.xlu0 %v70, 1
    %v73 = vpop.permute.xlu0 %72
    %74 = vrot.lane.b32.xlu0 %v71, 1
    %v75 = vpop.permute.xlu0 %74
    %76 = vrot.lane.b32.xlu0 %v70, 127
    %v77 = vpop.permute.xlu0 %76
    %78 = vrot.lane.b32.xlu0 %v71, 127
    %v79 = vpop.permute.xlu0 %78
    %v80 = vlaneseq
    %v81 = vand.u32 %v80, 127
    %vm82 = vcmp.lt.s32.totalorder %v81, 80
    %s83 = sld [smem:[#allocation8]]
    %v84 = vstv %s83
    %v85 = vmul.f32 %v73, %v84
    %v86 = vmul.f32 %v75, %v84
    %s87 = sld [smem:[#allocation8 + $0x1]]
    %v88 = vstv %s87
    %v89 = vmul.f32 %v70, %v88
    %v90 = vmul.f32 %v71, %v88
    %v91 = vadd.f32 %v85, %v89
    %v92 = vadd.f32 %v86, %v90
    %s93 = sld [smem:[#allocation8 + $0x2]]
    %v94 = vstv %s93
    %v95 = vmul.f32 %v77, %v94
    %v96 = vmul.f32 %v79, %v94
    %v97 = vadd.f32 %v91, %v95
    %v98 = vadd.f32 %v92, %v96
    %v99 = vsel %vm82, %v97, -inf
    %v100 = vsel %vm82, %v98, -inf
    %101 = vmax.xlane.f32.xlu0 %v99
    %v102 = vpop.xlane.xlu0 %101
    %103 = vmax.xlane.f32.xlu0 %v100
    %v104 = vpop.xlane.xlu0 %103
    %vm105 = vcmask 7168
    %106 = vst.msk [vmem:[#allocation2] sm:$0xff] %vm105, %v102
    %107 = vst.msk [vmem:[#allocation2 + $0x8] sm:$0xff] %vm105, %v104
    %s108 = sld [smem:[#allocation8 + $0x3]]
    %v109 = vstv %s108
    %v110 = vmul.f32 %v73, %v109
    %v111 = vmul.f32 %v75, %v109
    %s112 = sld [smem:[#allocation8 + $0x4]]
    %v113 = vstv %s112
    %v114 = vmul.f32 %v70, %v113
    %v115 = vmul.f32 %v71, %v113
    %v116 = vadd.f32 %v110, %v114
    %v117 = vadd.f32 %v111, %v115
    %s118 = sld [smem:[#allocation8 + $0x5]]
    %v119 = vstv %s118
    %v120 = vmul.f32 %v77, %v119
    %v121 = vmul.f32 %v79, %v119
    %v122 = vadd.f32 %v116, %v120
    %v123 = vadd.f32 %v117, %v121
    %v124 = vsel %vm82, %v122, -inf
    %v125 = vsel %vm82, %v123, -inf
    %126 = vmax.xlane.f32.xlu0 %v124
    %v127 = vpop.xlane.xlu0 %126
    %128 = vmax.xlane.f32.xlu0 %v125
    %v129 = vpop.xlane.xlu0 %128
    %vm130 = vcmask 15368
    %131 = vst.msk [vmem:[#allocation2] sm:$0xff] %vm130, %v127
    %132 = vst.msk [vmem:[#allocation2 + $0x8] sm:$0xff] %vm130, %v129
    %s133 = sld [smem:[#allocation8 + $0x6]]
    %v134 = vstv %s133
    %v135 = vmul.f32 %v73, %v134
    %v136 = vmul.f32 %v75, %v134
    %s137 = sld [smem:[#allocation8 + $0x7]]
    %v138 = vstv %s137
    %v139 = vmul.f32 %v70, %v138
    %v140 = vmul.f32 %v71, %v138
    %v141 = vadd.f32 %v135, %v139
    %v142 = vadd.f32 %v136, %v140
    %s143 = sld [smem:[#allocation8 + $0x8]]
    %v144 = vstv %s143
    %v145 = vmul.f32 %v77, %v144
    %v146 = vmul.f32 %v79, %v144
    %v147 = vadd.f32 %v141, %v145
    %v148 = vadd.f32 %v142, %v146
    %v149 = vsel %vm82, %v147, -inf
    %v150 = vsel %vm82, %v148, -inf
    %151 = vmax.xlane.f32.xlu0 %v149
    %v152 = vpop.xlane.xlu0 %151
    %153 = vmax.xlane.f32.xlu0 %v150
    %v154 = vpop.xlane.xlu0 %153
    %vm155 = vcmask 23568
    %156 = vst.msk [vmem:[#allocation2] sm:$0xff] %vm155, %v152
    %157 = vst.msk [vmem:[#allocation2 + $0x8] sm:$0xff] %vm155, %v154
    %s158 = sld [smem:[#allocation8 + $0x9]]
    %v159 = vstv %s158
    %v160 = vmul.f32 %v73, %v159
    %v161 = vmul.f32 %v75, %v159
    %s162 = sld [smem:[#allocation8 + $0xa]]
    %v163 = vstv %s162
    %v164 = vmul.f32 %v70, %v163
    %v165 = vmul.f32 %v71, %v163
    %v166 = vadd.f32 %v160, %v164
    %v167 = vadd.f32 %v161, %v165
    %s168 = sld [smem:[#allocation8 + $0xb]]
    %v169 = vstv %s168
    %v170 = vmul.f32 %v77, %v169
    %v171 = vmul.f32 %v79, %v169
    %v172 = vadd.f32 %v166, %v170
    %v173 = vadd.f32 %v167, %v171
    %v174 = vsel %vm82, %v172, -inf
    %v175 = vsel %vm82, %v173, -inf
    %176 = vmax.xlane.f32.xlu0 %v174
    %v177 = vpop.xlane.xlu0 %176
    %178 = vmax.xlane.f32.xlu0 %v175
    %v179 = vpop.xlane.xlu0 %178
    %vm180 = vcmask 31768
    %181 = vst.msk [vmem:[#allocation2] sm:$0xff] %vm180, %v177
    %182 = vst.msk [vmem:[#allocation2 + $0x8] sm:$0xff] %vm180, %v179
    %s183 = sld [smem:[#allocation8 + $0xc]]
    %v184 = vstv %s183
    %v185 = vmul.f32 %v73, %v184
    %v186 = vmul.f32 %v75, %v184
    %s187 = sld [smem:[#allocation8 + $0xd]]
    %v188 = vstv %s187
    %v189 = vmul.f32 %v70, %v188
    %v190 = vmul.f32 %v71, %v188
    %v191 = vadd.f32 %v185, %v189
    %v192 = vadd.f32 %v186, %v190
    %s193 = sld [smem:[#allocation8 + $0xe]]
    %v194 = vstv %s193
    %v195 = vmul.f32 %v77, %v194
    %v196 = vmul.f32 %v79, %v194
    %v197 = vadd.f32 %v191, %v195
    %v198 = vadd.f32 %v192, %v196
    %v199 = vsel %vm82, %v197, -inf
    %v200 = vsel %vm82, %v198, -inf
    %201 = vmax.xlane.f32.xlu0 %v199
    %v202 = vpop.xlane.xlu0 %201
    %203 = vmax.xlane.f32.xlu0 %v200
    %v204 = vpop.xlane.xlu0 %203
    %vm205 = vcmask 39968
    %206 = vst.msk [vmem:[#allocation2] sm:$0xff] %vm205, %v202
    %207 = vst.msk [vmem:[#allocation2 + $0x8] sm:$0xff] %vm205, %v204
    %s208 = sld [smem:[#allocation8 + $0xf]]
    %v209 = vstv %s208
    %v210 = vmul.f32 %v73, %v209
    %v211 = vmul.f32 %v75, %v209
    %s212 = sld [smem:[#allocation8 + $0x10]]
    %v213 = vstv %s212
    %v214 = vmul.f32 %v70, %v213
    %v215 = vmul.f32 %v71, %v213
    %v216 = vadd.f32 %v210, %v214
    %v217 = vadd.f32 %v211, %v215
    %s218 = sld [smem:[#allocation8 + $0x11]]
    %v219 = vstv %s218
    %v220 = vmul.f32 %v77, %v219
    %v221 = vmul.f32 %v79, %v219
    %v222 = vadd.f32 %v216, %v220
    %v223 = vadd.f32 %v217, %v221
    %v224 = vsel %vm82, %v222, -inf
    %v225 = vsel %vm82, %v223, -inf
    %226 = vmax.xlane.f32.xlu0 %v224
    %v227 = vpop.xlane.xlu0 %226
    %228 = vmax.xlane.f32.xlu0 %v225
    %v229 = vpop.xlane.xlu0 %228
    %vm230 = vcmask 48168
    %231 = vst.msk [vmem:[#allocation2] sm:$0xff] %vm230, %v227
    %232 = vst.msk [vmem:[#allocation2 + $0x8] sm:$0xff] %vm230, %v229
    %s233 = sld [smem:[#allocation8 + $0x12]]
    %v234 = vstv %s233
    %v235 = vmul.f32 %v73, %v234
    %v236 = vmul.f32 %v75, %v234
    %s237 = sld [smem:[#allocation8 + $0x13]]
    %v238 = vstv %s237
    %v239 = vmul.f32 %v70, %v238
    %v240 = vmul.f32 %v71, %v238
    %v241 = vadd.f32 %v235, %v239
    %v242 = vadd.f32 %v236, %v240
    %s243 = sld [smem:[#allocation8 + $0x14]]
    %v244 = vstv %s243
    %v245 = vmul.f32 %v77, %v244
    %v246 = vmul.f32 %v79, %v244
    %v247 = vadd.f32 %v241, %v245
    %v248 = vadd.f32 %v242, %v246
    %v249 = vsel %vm82, %v247, -inf
    %v250 = vsel %vm82, %v248, -inf
    %251 = vmax.xlane.f32.xlu0 %v249
    %v252 = vpop.xlane.xlu0 %251
    %253 = vmax.xlane.f32.xlu0 %v250
    %v254 = vpop.xlane.xlu0 %253
    %vm255 = vcmask 56368
    %256 = vst.msk [vmem:[#allocation2] sm:$0xff] %vm255, %v252
    %257 = vst.msk [vmem:[#allocation2 + $0x8] sm:$0xff] %vm255, %v254
    %s258 = sld [smem:[#allocation8 + $0x15]]
    %v259 = vstv %s258
    %v260 = vmul.f32 %v73, %v259
    %v261 = vmul.f32 %v75, %v259
    %s262 = sld [smem:[#allocation8 + $0x16]]
    %v263 = vstv %s262
    %v264 = vmul.f32 %v70, %v263
    %v265 = vmul.f32 %v71, %v263
    %v266 = vadd.f32 %v260, %v264
    %v267 = vadd.f32 %v261, %v265
    %s268 = sld [smem:[#allocation8 + $0x17]]
    %v269 = vstv %s268
    %v270 = vmul.f32 %v77, %v269
    %v271 = vmul.f32 %v79, %v269
    %v272 = vadd.f32 %v266, %v270
    %v273 = vadd.f32 %v267, %v271
    %v274 = vsel %vm82, %v272, -inf
    %v275 = vsel %vm82, %v273, -inf
    %276 = vmax.xlane.f32.xlu0 %v274
    %v277 = vpop.xlane.xlu0 %276
    %278 = vmax.xlane.f32.xlu0 %v275
    %v279 = vpop.xlane.xlu0 %278
    %vm280 = vcmask 64568
    %281 = vst.msk [vmem:[#allocation2] sm:$0xff] %vm280, %v277
    %282 = vst.msk [vmem:[#allocation2 + $0x8] sm:$0xff] %vm280, %v279
    %s283 = sld [smem:[#allocation8 + $0x18]]
    %v284 = vstv %s283
    %v285 = vmul.f32 %v73, %v284
    %v286 = vmul.f32 %v75, %v284
    %s287 = sld [smem:[#allocation8 + $0x19]]
    %v288 = vstv %s287
    %v289 = vmul.f32 %v70, %v288
    %v290 = vmul.f32 %v71, %v288
    %v291 = vadd.f32 %v285, %v289
    %v292 = vadd.f32 %v286, %v290
    %s293 = sld [smem:[#allocation8 + $0x1a]]
    %v294 = vstv %s293
    %v295 = vmul.f32 %v77, %v294
    %v296 = vmul.f32 %v79, %v294
    %v297 = vadd.f32 %v291, %v295
    %v298 = vadd.f32 %v292, %v296
    %v299 = vsel %vm82, %v297, -inf
    %v300 = vsel %vm82, %v298, -inf
    %301 = vmax.xlane.f32.xlu0 %v299
    %v302 = vpop.xlane.xlu0 %301
    %303 = vmax.xlane.f32.xlu0 %v300
    %v304 = vpop.xlane.xlu0 %303
    %vm305 = vcmask 72768
    %306 = vst.msk [vmem:[#allocation2] sm:$0xff] %vm305, %v302
    %307 = vst.msk [vmem:[#allocation2 + $0x8] sm:$0xff] %vm305, %v304
    %s308 = sld [smem:[#allocation8 + $0x1b]]
    %v309 = vstv %s308
    %v310 = vmul.f32 %v73, %v309
    %v311 = vmul.f32 %v75, %v309
    %s312 = sld [smem:[#allocation8 + $0x1c]]
    %v313 = vstv %s312
    %v314 = vmul.f32 %v70, %v313
    %v315 = vmul.f32 %v71, %v313
    %v316 = vadd.f32 %v310, %v314
    %v317 = vadd.f32 %v311, %v315
    %s318 = sld [smem:[#allocation8 + $0x1d]]
    %v319 = vstv %s318
    %v320 = vmul.f32 %v77, %v319
    %v321 = vmul.f32 %v79, %v319
    %v322 = vadd.f32 %v316, %v320
    %v323 = vadd.f32 %v317, %v321
    %v324 = vsel %vm82, %v322, -inf
    %v325 = vsel %vm82, %v323, -inf
    %326 = vmax.xlane.f32.xlu0 %v324
    %v327 = vpop.xlane.xlu0 %326
    %328 = vmax.xlane.f32.xlu0 %v325
    %v329 = vpop.xlane.xlu0 %328
    %vm330 = vcmask 80968
    %331 = vst.msk [vmem:[#allocation2] sm:$0xff] %vm330, %v327
    %332 = vst.msk [vmem:[#allocation2 + $0x8] sm:$0xff] %vm330, %v329
    %s333 = sld [smem:[#allocation8 + $0x1e]]
    %v334 = vstv %s333
    %v335 = vmul.f32 %v73, %v334
    %v336 = vmul.f32 %v75, %v334
    %s337 = sld [smem:[#allocation8 + $0x1f]]
    %v338 = vstv %s337
    %v339 = vmul.f32 %v70, %v338
    %v340 = vmul.f32 %v71, %v338
    %v341 = vadd.f32 %v335, %v339
    %v342 = vadd.f32 %v336, %v340
    %s343 = sld [smem:[#allocation8 + $0x20]]
    %v344 = vstv %s343
    %v345 = vmul.f32 %v77, %v344
    %v346 = vmul.f32 %v79, %v344
    %v347 = vadd.f32 %v341, %v345
    %v348 = vadd.f32 %v342, %v346
    %v349 = vsel %vm82, %v347, -inf
    %v350 = vsel %vm82, %v348, -inf
    %351 = vmax.xlane.f32.xlu0 %v349
    %v352 = vpop.xlane.xlu0 %351
    %353 = vmax.xlane.f32.xlu0 %v350
    %v354 = vpop.xlane.xlu0 %353
    %vm355 = vcmask 89168
    %356 = vst.msk [vmem:[#allocation2] sm:$0xff] %vm355, %v352
    %357 = vst.msk [vmem:[#allocation2 + $0x8] sm:$0xff] %vm355, %v354
    %s358 = sld [smem:[#allocation8 + $0x21]]
    %v359 = vstv %s358
    %v360 = vmul.f32 %v73, %v359
    %v361 = vmul.f32 %v75, %v359
    %s362 = sld [smem:[#allocation8 + $0x22]]
    %v363 = vstv %s362
    %v364 = vmul.f32 %v70, %v363
    %v365 = vmul.f32 %v71, %v363
    %v366 = vadd.f32 %v360, %v364
    %v367 = vadd.f32 %v361, %v365
    %s368 = sld [smem:[#allocation8 + $0x23]]
    %v369 = vstv %s368
    %v370 = vmul.f32 %v77, %v369
    %v371 = vmul.f32 %v79, %v369
    %v372 = vadd.f32 %v366, %v370
    %v373 = vadd.f32 %v367, %v371
    %v374 = vsel %vm82, %v372, -inf
    %v375 = vsel %vm82, %v373, -inf
    %376 = vmax.xlane.f32.xlu0 %v374
    %v377 = vpop.xlane.xlu0 %376
    %378 = vmax.xlane.f32.xlu0 %v375
    %v379 = vpop.xlane.xlu0 %378
    %vm380 = vcmask 97368
    %381 = vst.msk [vmem:[#allocation2] sm:$0xff] %vm380, %v377
    %382 = vst.msk [vmem:[#allocation2 + $0x8] sm:$0xff] %vm380, %v379
    %s383 = sld [smem:[#allocation8 + $0x24]]
    %v384 = vstv %s383
    %v385 = vmul.f32 %v73, %v384
    %v386 = vmul.f32 %v75, %v384
    %s387 = sld [smem:[#allocation8 + $0x25]]
    %v388 = vstv %s387
    %v389 = vmul.f32 %v70, %v388
    %v390 = vmul.f32 %v71, %v388
    %v391 = vadd.f32 %v385, %v389
    %v392 = vadd.f32 %v386, %v390
    %s393 = sld [smem:[#allocation8 + $0x26]]
    %v394 = vstv %s393
    %v395 = vmul.f32 %v77, %v394
    %v396 = vmul.f32 %v79, %v394
    %v397 = vadd.f32 %v391, %v395
    %v398 = vadd.f32 %v392, %v396
    %v399 = vsel %vm82, %v397, -inf
    %v400 = vsel %vm82, %v398, -inf
    %401 = vmax.xlane.f32.xlu0 %v399
    %v402 = vpop.xlane.xlu0 %401
    %403 = vmax.xlane.f32.xlu0 %v400
    %v404 = vpop.xlane.xlu0 %403
    %vm405 = vcmask 105568
    %406 = vst.msk [vmem:[#allocation2] sm:$0xff] %vm405, %v402
    %407 = vst.msk [vmem:[#allocation2 + $0x8] sm:$0xff] %vm405, %v404
    %s408 = sld [smem:[#allocation8 + $0x27]]
    %v409 = vstv %s408
    %v410 = vmul.f32 %v73, %v409
    %v411 = vmul.f32 %v75, %v409
    %s412 = sld [smem:[#allocation8 + $0x28]]
    %v413 = vstv %s412
    %v414 = vmul.f32 %v70, %v413
    %v415 = vmul.f32 %v71, %v413
    %v416 = vadd.f32 %v410, %v414
    %v417 = vadd.f32 %v411, %v415
    %s418 = sld [smem:[#allocation8 + $0x29]]
    %v419 = vstv %s418
    %v420 = vmul.f32 %v77, %v419
    %v421 = vmul.f32 %v79, %v419
    %v422 = vadd.f32 %v416, %v420
    %v423 = vadd.f32 %v417, %v421
    %v424 = vsel %vm82, %v422, -inf
    %v425 = vsel %vm82, %v423, -inf
    %426 = vmax.xlane.f32.xlu0 %v424
    %v427 = vpop.xlane.xlu0 %426
    %428 = vmax.xlane.f32.xlu0 %v425
    %v429 = vpop.xlane.xlu0 %428
    %vm430 = vcmask 113768
    %431 = vst.msk [vmem:[#allocation2] sm:$0xff] %vm430, %v427
    %432 = vst.msk [vmem:[#allocation2 + $0x8] sm:$0xff] %vm430, %v429
    %s433 = sld [smem:[#allocation8 + $0x2a]]
    %v434 = vstv %s433
    %v435 = vmul.f32 %v73, %v434
    %v436 = vmul.f32 %v75, %v434
    %s437 = sld [smem:[#allocation8 + $0x2b]]
    %v438 = vstv %s437
    %v439 = vmul.f32 %v70, %v438
    %v440 = vmul.f32 %v71, %v438
    %v441 = vadd.f32 %v435, %v439
    %v442 = vadd.f32 %v436, %v440
    %s443 = sld [smem:[#allocation8 + $0x2c]]
    %v444 = vstv %s443
    %v445 = vmul.f32 %v77, %v444
    %v446 = vmul.f32 %v79, %v444
    %v447 = vadd.f32 %v441, %v445
    %v448 = vadd.f32 %v442, %v446
    %v449 = vsel %vm82, %v447, -inf
    %v450 = vsel %vm82, %v448, -inf
    %451 = vmax.xlane.f32.xlu0 %v449
    %v452 = vpop.xlane.xlu0 %451
    %453 = vmax.xlane.f32.xlu0 %v450
    %v454 = vpop.xlane.xlu0 %453
    %vm455 = vcmask 121968
    %456 = vst.msk [vmem:[#allocation2] sm:$0xff] %vm455, %v452
    %457 = vst.msk [vmem:[#allocation2 + $0x8] sm:$0xff] %vm455, %v454
    %s458 = sld [smem:[#allocation8 + $0x2d]]
    %v459 = vstv %s458
    %v460 = vmul.f32 %v73, %v459
    %v461 = vmul.f32 %v75, %v459
    %s462 = sld [smem:[#allocation8 + $0x2e]]
    %v463 = vstv %s462
    %v464 = vmul.f32 %v70, %v463
    %v465 = vmul.f32 %v71, %v463
    %v466 = vadd.f32 %v460, %v464
    %v467 = vadd.f32 %v461, %v465
    %s468 = sld [smem:[#allocation8 + $0x2f]]
    %v469 = vstv %s468
    %v470 = vmul.f32 %v77, %v469
    %v471 = vmul.f32 %v79, %v469
    %v472 = vadd.f32 %v466, %v470
    %v473 = vadd.f32 %v467, %v471
    %v474 = vsel %vm82, %v472, -inf
    %v475 = vsel %vm82, %v473, -inf
    %476 = vmax.xlane.f32.xlu0 %v474
    %v477 = vpop.xlane.xlu0 %476
    %478 = vmax.xlane.f32.xlu0 %v475
    %v479 = vpop.xlane.xlu0 %478
    %vm480 = vcmask 130168
    %481 = vst.msk [vmem:[#allocation2] sm:$0xff] %vm480, %v477
    %482 = vst.msk [vmem:[#allocation2 + $0x8] sm:$0xff] %vm480, %v479
    %s483 = sld [smem:[#allocation8 + $0x30]]
    %v484 = vstv %s483
    %v485 = vmul.f32 %v73, %v484
    %v486 = vmul.f32 %v75, %v484
    %s487 = sld [smem:[#allocation8 + $0x31]]
    %v488 = vstv %s487
    %v489 = vmul.f32 %v70, %v488
    %v490 = vmul.f32 %v71, %v488
    %v491 = vadd.f32 %v485, %v489
    %v492 = vadd.f32 %v486, %v490
    %s493 = sld [smem:[#allocation8 + $0x32]]
    %v494 = vstv %s493
    %v495 = vmul.f32 %v77, %v494
    %v496 = vmul.f32 %v79, %v494
    %v497 = vadd.f32 %v491, %v495
    %v498 = vadd.f32 %v492, %v496
    %v499 = vsel %vm82, %v497, -inf
    %v500 = vsel %vm82, %v498, -inf
    %501 = vmax.xlane.f32.xlu0 %v499
    %v502 = vpop.xlane.xlu0 %501
    %503 = vmax.xlane.f32.xlu0 %v500
    %v504 = vpop.xlane.xlu0 %503
    %vm505 = vcmask 138368
    %506 = vst.msk [vmem:[#allocation2] sm:$0xff] %vm505, %v502
    %507 = vst.msk [vmem:[#allocation2 + $0x8] sm:$0xff] %vm505, %v504
    %s508 = sld [smem:[#allocation8 + $0x33]]
    %v509 = vstv %s508
    %v510 = vmul.f32 %v73, %v509
    %v511 = vmul.f32 %v75, %v509
    %s512 = sld [smem:[#allocation8 + $0x34]]
    %v513 = vstv %s512
    %v514 = vmul.f32 %v70, %v513
    %v515 = vmul.f32 %v71, %v513
    %v516 = vadd.f32 %v510, %v514
    %v517 = vadd.f32 %v511, %v515
    %s518 = sld [smem:[#allocation8 + $0x35]]
    %v519 = vstv %s518
    %v520 = vmul.f32 %v77, %v519
    %v521 = vmul.f32 %v79, %v519
    %v522 = vadd.f32 %v516, %v520
    %v523 = vadd.f32 %v517, %v521
    %v524 = vsel %vm82, %v522, -inf
    %v525 = vsel %vm82, %v523, -inf
    %526 = vmax.xlane.f32.xlu0 %v524
    %v527 = vpop.xlane.xlu0 %526
    %528 = vmax.xlane.f32.xlu0 %v525
    %v529 = vpop.xlane.xlu0 %528
    %vm530 = vcmask 146568
    %531 = vst.msk [vmem:[#allocation2] sm:$0xff] %vm530, %v527
    %532 = vst.msk [vmem:[#allocation2 + $0x8] sm:$0xff] %vm530, %v529
    %s533 = sld [smem:[#allocation8 + $0x36]]
    %v534 = vstv %s533
    %v535 = vmul.f32 %v73, %v534
    %v536 = vmul.f32 %v75, %v534
    %s537 = sld [smem:[#allocation8 + $0x37]]
    %v538 = vstv %s537
    %v539 = vmul.f32 %v70, %v538
    %v540 = vmul.f32 %v71, %v538
    %v541 = vadd.f32 %v535, %v539
    %v542 = vadd.f32 %v536, %v540
    %s543 = sld [smem:[#allocation8 + $0x38]]
    %v544 = vstv %s543
    %v545 = vmul.f32 %v77, %v544
    %v546 = vmul.f32 %v79, %v544
    %v547 = vadd.f32 %v541, %v545
    %v548 = vadd.f32 %v542, %v546
    %v549 = vsel %vm82, %v547, -inf
    %v550 = vsel %vm82, %v548, -inf
    %551 = vmax.xlane.f32.xlu0 %v549
    %v552 = vpop.xlane.xlu0 %551
    %553 = vmax.xlane.f32.xlu0 %v550
    %v554 = vpop.xlane.xlu0 %553
    %vm555 = vcmask 154768
    %556 = vst.msk [vmem:[#allocation2] sm:$0xff] %vm555, %v552
    %557 = vst.msk [vmem:[#allocation2 + $0x8] sm:$0xff] %vm555, %v554
    %s558 = sld [smem:[#allocation8 + $0x39]]
    %v559 = vstv %s558
    %v560 = vmul.f32 %v73, %v559
    %v561 = vmul.f32 %v75, %v559
    %s562 = sld [smem:[#allocation8 + $0x3a]]
    %v563 = vstv %s562
    %v564 = vmul.f32 %v70, %v563
    %v565 = vmul.f32 %v71, %v563
    %v566 = vadd.f32 %v560, %v564
    %v567 = vadd.f32 %v561, %v565
    %s568 = sld [smem:[#allocation8 + $0x3b]]
    %v569 = vstv %s568
    %v570 = vmul.f32 %v77, %v569
    %v571 = vmul.f32 %v79, %v569
    %v572 = vadd.f32 %v566, %v570
    %v573 = vadd.f32 %v567, %v571
    %v574 = vsel %vm82, %v572, -inf
    %v575 = vsel %vm82, %v573, -inf
    %576 = vmax.xlane.f32.xlu0 %v574
    %v577 = vpop.xlane.xlu0 %576
    %578 = vmax.xlane.f32.xlu0 %v575
    %v579 = vpop.xlane.xlu0 %578
    %vm580 = vcmask 162968
    %581 = vst.msk [vmem:[#allocation2] sm:$0xff] %vm580, %v577
    %582 = vst.msk [vmem:[#allocation2 + $0x8] sm:$0xff] %vm580, %v579
    %s583 = sld [smem:[#allocation8 + $0x3c]]
    %v584 = vstv %s583
    %v585 = vmul.f32 %v73, %v584
    %v586 = vmul.f32 %v75, %v584
    %s587 = sld [smem:[#allocation8 + $0x3d]]
    %v588 = vstv %s587
    %v589 = vmul.f32 %v70, %v588
    %v590 = vmul.f32 %v71, %v588
    %v591 = vadd.f32 %v585, %v589
    %v592 = vadd.f32 %v586, %v590
    %s593 = sld [smem:[#allocation8 + $0x3e]]
    %v594 = vstv %s593
    %v595 = vmul.f32 %v77, %v594
    %v596 = vmul.f32 %v79, %v594
    %v597 = vadd.f32 %v591, %v595
    %v598 = vadd.f32 %v592, %v596
    %v599 = vsel %vm82, %v597, -inf
    %v600 = vsel %vm82, %v598, -inf
    %601 = vmax.xlane.f32.xlu0 %v599
    %v602 = vpop.xlane.xlu0 %601
    %603 = vmax.xlane.f32.xlu0 %v600
    %v604 = vpop.xlane.xlu0 %603
    %vm605 = vcmask 171168
    %606 = vst.msk [vmem:[#allocation2] sm:$0xff] %vm605, %v602
    %607 = vst.msk [vmem:[#allocation2 + $0x8] sm:$0xff] %vm605, %v604
    %s608 = sld [smem:[#allocation8 + $0x3f]]
    %v609 = vstv %s608
    %v610 = vmul.f32 %v73, %v609
    %v611 = vmul.f32 %v75, %v609
    %s612 = sld [smem:[#allocation8 + $0x40]]
    %v613 = vstv %s612
    %v614 = vmul.f32 %v70, %v613
    %v615 = vmul.f32 %v71, %v613
    %v616 = vadd.f32 %v610, %v614
    %v617 = vadd.f32 %v611, %v615
    %s618 = sld [smem:[#allocation8 + $0x41]]
    %v619 = vstv %s618
    %v620 = vmul.f32 %v77, %v619
    %v621 = vmul.f32 %v79, %v619
    %v622 = vadd.f32 %v616, %v620
    %v623 = vadd.f32 %v617, %v621
    %v624 = vsel %vm82, %v622, -inf
    %v625 = vsel %vm82, %v623, -inf
    %626 = vmax.xlane.f32.xlu0 %v624
    %v627 = vpop.xlane.xlu0 %626
    %628 = vmax.xlane.f32.xlu0 %v625
    %v629 = vpop.xlane.xlu0 %628
    %vm630 = vcmask 179368
    %631 = vst.msk [vmem:[#allocation2] sm:$0xff] %vm630, %v627
    %632 = vst.msk [vmem:[#allocation2 + $0x8] sm:$0xff] %vm630, %v629
    %s633 = sld [smem:[#allocation8 + $0x42]]
    %v634 = vstv %s633
    %v635 = vmul.f32 %v73, %v634
    %v636 = vmul.f32 %v75, %v634
    %s637 = sld [smem:[#allocation8 + $0x43]]
    %v638 = vstv %s637
    %v639 = vmul.f32 %v70, %v638
    %v640 = vmul.f32 %v71, %v638
    %v641 = vadd.f32 %v635, %v639
    %v642 = vadd.f32 %v636, %v640
    %s643 = sld [smem:[#allocation8 + $0x44]]
    %v644 = vstv %s643
    %v645 = vmul.f32 %v77, %v644
    %v646 = vmul.f32 %v79, %v644
    %v647 = vadd.f32 %v641, %v645
    %v648 = vadd.f32 %v642, %v646
    %v649 = vsel %vm82, %v647, -inf
    %v650 = vsel %vm82, %v648, -inf
    %651 = vmax.xlane.f32.xlu0 %v649
    %v652 = vpop.xlane.xlu0 %651
    %653 = vmax.xlane.f32.xlu0 %v650
    %v654 = vpop.xlane.xlu0 %653
    %vm655 = vcmask 187568
    %656 = vst.msk [vmem:[#allocation2] sm:$0xff] %vm655, %v652
    %657 = vst.msk [vmem:[#allocation2 + $0x8] sm:$0xff] %vm655, %v654
    %s658 = sld [smem:[#allocation8 + $0x45]]
    %v659 = vstv %s658
    %v660 = vmul.f32 %v73, %v659
    %v661 = vmul.f32 %v75, %v659
    %s662 = sld [smem:[#allocation8 + $0x46]]
    %v663 = vstv %s662
    %v664 = vmul.f32 %v70, %v663
    %v665 = vmul.f32 %v71, %v663
    %v666 = vadd.f32 %v660, %v664
    %v667 = vadd.f32 %v661, %v665
    %s668 = sld [smem:[#allocation8 + $0x47]]
    %v669 = vstv %s668
    %v670 = vmul.f32 %v77, %v669
    %v671 = vmul.f32 %v79, %v669
    %v672 = vadd.f32 %v666, %v670
    %v673 = vadd.f32 %v667, %v671
    %v674 = vsel %vm82, %v672, -inf
    %v675 = vsel %vm82, %v673, -inf
    %676 = vmax.xlane.f32.xlu0 %v674
    %v677 = vpop.xlane.xlu0 %676
    %678 = vmax.xlane.f32.xlu0 %v675
    %v679 = vpop.xlane.xlu0 %678
    %vm680 = vcmask 195768
    %681 = vst.msk [vmem:[#allocation2] sm:$0xff] %vm680, %v677
    %682 = vst.msk [vmem:[#allocation2 + $0x8] sm:$0xff] %vm680, %v679
    %s683 = sld [smem:[#allocation8 + $0x48]]
    %v684 = vstv %s683
    %v685 = vmul.f32 %v73, %v684
    %v686 = vmul.f32 %v75, %v684
    %s687 = sld [smem:[#allocation8 + $0x49]]
    %v688 = vstv %s687
    %v689 = vmul.f32 %v70, %v688
    %v690 = vmul.f32 %v71, %v688
    %v691 = vadd.f32 %v685, %v689
    %v692 = vadd.f32 %v686, %v690
    %s693 = sld [smem:[#allocation8 + $0x4a]]
    %v694 = vstv %s693
    %v695 = vmul.f32 %v77, %v694
    %v696 = vmul.f32 %v79, %v694
    %v697 = vadd.f32 %v691, %v695
    %v698 = vadd.f32 %v692, %v696
    %v699 = vsel %vm82, %v697, -inf
    %v700 = vsel %vm82, %v698, -inf
    %701 = vmax.xlane.f32.xlu0 %v699
    %v702 = vpop.xlane.xlu0 %701
    %703 = vmax.xlane.f32.xlu0 %v700
    %v704 = vpop.xlane.xlu0 %703
    %vm705 = vcmask 203968
    %706 = vst.msk [vmem:[#allocation2] sm:$0xff] %vm705, %v702
    %707 = vst.msk [vmem:[#allocation2 + $0x8] sm:$0xff] %vm705, %v704
    %s708 = sld [smem:[#allocation8 + $0x4b]]
    %v709 = vstv %s708
    %v710 = vmul.f32 %v73, %v709
    %v711 = vmul.f32 %v75, %v709
    %s712 = sld [smem:[#allocation8 + $0x4c]]
    %v713 = vstv %s712
    %v714 = vmul.f32 %v70, %v713
    %v715 = vmul.f32 %v71, %v713
    %v716 = vadd.f32 %v710, %v714
    %v717 = vadd.f32 %v711, %v715
    %s718 = sld [smem:[#allocation8 + $0x4d]]
    %v719 = vstv %s718
    %v720 = vmul.f32 %v77, %v719
    %v721 = vmul.f32 %v79, %v719
    %v722 = vadd.f32 %v716, %v720
    %v723 = vadd.f32 %v717, %v721
    %v724 = vsel %vm82, %v722, -inf
    %v725 = vsel %vm82, %v723, -inf
    %726 = vmax.xlane.f32.xlu0 %v724
    %v727 = vpop.xlane.xlu0 %726
    %728 = vmax.xlane.f32.xlu0 %v725
    %v729 = vpop.xlane.xlu0 %728
    %vm730 = vcmask 212168
    %731 = vst.msk [vmem:[#allocation2] sm:$0xff] %vm730, %v727
    %732 = vst.msk [vmem:[#allocation2 + $0x8] sm:$0xff] %vm730, %v729
    %s733 = sld [smem:[#allocation8 + $0x4e]]
    %v734 = vstv %s733
    %v735 = vmul.f32 %v73, %v734
    %v736 = vmul.f32 %v75, %v734
    %s737 = sld [smem:[#allocation8 + $0x4f]]
    %v738 = vstv %s737
    %v739 = vmul.f32 %v70, %v738
    %v740 = vmul.f32 %v71, %v738
    %v741 = vadd.f32 %v735, %v739
    %v742 = vadd.f32 %v736, %v740
    %s743 = sld [smem:[#allocation8 + $0x50]]
    %v744 = vstv %s743
    %v745 = vmul.f32 %v77, %v744
    %v746 = vmul.f32 %v79, %v744
    %v747 = vadd.f32 %v741, %v745
    %v748 = vadd.f32 %v742, %v746
    %v749 = vsel %vm82, %v747, -inf
    %v750 = vsel %vm82, %v748, -inf
    %751 = vmax.xlane.f32.xlu0 %v749
    %v752 = vpop.xlane.xlu0 %751
    %753 = vmax.xlane.f32.xlu0 %v750
    %v754 = vpop.xlane.xlu0 %753
    %vm755 = vcmask 220368
    %756 = vst.msk [vmem:[#allocation2] sm:$0xff] %vm755, %v752
    %757 = vst.msk [vmem:[#allocation2 + $0x8] sm:$0xff] %vm755, %v754
    %s758 = sld [smem:[#allocation8 + $0x51]]
    %v759 = vstv %s758
    %v760 = vmul.f32 %v73, %v759
    %v761 = vmul.f32 %v75, %v759
    %s762 = sld [smem:[#allocation8 + $0x52]]
    %v763 = vstv %s762
    %v764 = vmul.f32 %v70, %v763
    %v765 = vmul.f32 %v71, %v763
    %v766 = vadd.f32 %v760, %v764
    %v767 = vadd.f32 %v761, %v765
    %s768 = sld [smem:[#allocation8 + $0x53]]
    %v769 = vstv %s768
    %v770 = vmul.f32 %v77, %v769
    %v771 = vmul.f32 %v79, %v769
    %v772 = vadd.f32 %v766, %v770
    %v773 = vadd.f32 %v767, %v771
    %v774 = vsel %vm82, %v772, -inf
    %v775 = vsel %vm82, %v773, -inf
    %776 = vmax.xlane.f32.xlu0 %v774
    %v777 = vpop.xlane.xlu0 %776
    %778 = vmax.xlane.f32.xlu0 %v775
    %v779 = vpop.xlane.xlu0 %778
    %vm780 = vcmask 228568
    %781 = vst.msk [vmem:[#allocation2] sm:$0xff] %vm780, %v777
    %782 = vst.msk [vmem:[#allocation2 + $0x8] sm:$0xff] %vm780, %v779
    %s783 = sld [smem:[#allocation8 + $0x54]]
    %v784 = vstv %s783
    %v785 = vmul.f32 %v73, %v784
    %v786 = vmul.f32 %v75, %v784
    %s787 = sld [smem:[#allocation8 + $0x55]]
    %v788 = vstv %s787
    %v789 = vmul.f32 %v70, %v788
    %v790 = vmul.f32 %v71, %v788
    %v791 = vadd.f32 %v785, %v789
    %v792 = vadd.f32 %v786, %v790
    %s793 = sld [smem:[#allocation8 + $0x56]]
    %v794 = vstv %s793
    %v795 = vmul.f32 %v77, %v794
    %v796 = vmul.f32 %v79, %v794
    %v797 = vadd.f32 %v791, %v795
    %v798 = vadd.f32 %v792, %v796
    %v799 = vsel %vm82, %v797, -inf
    %v800 = vsel %vm82, %v798, -inf
    %801 = vmax.xlane.f32.xlu0 %v799
    %v802 = vpop.xlane.xlu0 %801
    %803 = vmax.xlane.f32.xlu0 %v800
    %v804 = vpop.xlane.xlu0 %803
    %vm805 = vcmask 236768
    %806 = vst.msk [vmem:[#allocation2] sm:$0xff] %vm805, %v802
    %807 = vst.msk [vmem:[#allocation2 + $0x8] sm:$0xff] %vm805, %v804
    %s808 = sld [smem:[#allocation8 + $0x57]]
    %v809 = vstv %s808
    %v810 = vmul.f32 %v73, %v809
    %v811 = vmul.f32 %v75, %v809
    %s812 = sld [smem:[#allocation8 + $0x58]]
    %v813 = vstv %s812
    %v814 = vmul.f32 %v70, %v813
    %v815 = vmul.f32 %v71, %v813
    %v816 = vadd.f32 %v810, %v814
    %v817 = vadd.f32 %v811, %v815
    %s818 = sld [smem:[#allocation8 + $0x59]]
    %v819 = vstv %s818
    %v820 = vmul.f32 %v77, %v819
    %v821 = vmul.f32 %v79, %v819
    %v822 = vadd.f32 %v816, %v820
    %v823 = vadd.f32 %v817, %v821
    %v824 = vsel %vm82, %v822, -inf
    %v825 = vsel %vm82, %v823, -inf
    %826 = vmax.xlane.f32.xlu0 %v824
    %v827 = vpop.xlane.xlu0 %826
    %828 = vmax.xlane.f32.xlu0 %v825
    %v829 = vpop.xlane.xlu0 %828
    %vm830 = vcmask 244968
    %831 = vst.msk [vmem:[#allocation2] sm:$0xff] %vm830, %v827
    %832 = vst.msk [vmem:[#allocation2 + $0x8] sm:$0xff] %vm830, %v829
    %s833 = sld [smem:[#allocation8 + $0x5a]]
    %v834 = vstv %s833
    %v835 = vmul.f32 %v73, %v834
    %v836 = vmul.f32 %v75, %v834
    %s837 = sld [smem:[#allocation8 + $0x5b]]
    %v838 = vstv %s837
    %v839 = vmul.f32 %v70, %v838
    %v840 = vmul.f32 %v71, %v838
    %v841 = vadd.f32 %v835, %v839
    %v842 = vadd.f32 %v836, %v840
    %s843 = sld [smem:[#allocation8 + $0x5c]]
    %v844 = vstv %s843
    %v845 = vmul.f32 %v77, %v844
    %v846 = vmul.f32 %v79, %v844
    %v847 = vadd.f32 %v841, %v845
    %v848 = vadd.f32 %v842, %v846
    %v849 = vsel %vm82, %v847, -inf
    %v850 = vsel %vm82, %v848, -inf
    %851 = vmax.xlane.f32.xlu0 %v849
    %v852 = vpop.xlane.xlu0 %851
    %853 = vmax.xlane.f32.xlu0 %v850
    %v854 = vpop.xlane.xlu0 %853
    %vm855 = vcmask 253168
    %856 = vst.msk [vmem:[#allocation2] sm:$0xff] %vm855, %v852
    %857 = vst.msk [vmem:[#allocation2 + $0x8] sm:$0xff] %vm855, %v854
    %s858 = sld [smem:[#allocation8 + $0x5d]]
    %v859 = vstv %s858
    %v860 = vmul.f32 %v73, %v859
    %v861 = vmul.f32 %v75, %v859
    %s862 = sld [smem:[#allocation8 + $0x5e]]
    %v863 = vstv %s862
    %v864 = vmul.f32 %v70, %v863
    %v865 = vmul.f32 %v71, %v863
    %v866 = vadd.f32 %v860, %v864
    %v867 = vadd.f32 %v861, %v865
    %s868 = sld [smem:[#allocation8 + $0x5f]]
    %v869 = vstv %s868
    %v870 = vmul.f32 %v77, %v869
    %v871 = vmul.f32 %v79, %v869
    %v872 = vadd.f32 %v866, %v870
    %v873 = vadd.f32 %v867, %v871
    %v874 = vsel %vm82, %v872, -inf
    %v875 = vsel %vm82, %v873, -inf
    %876 = vmax.xlane.f32.xlu0 %v874
    %v877 = vpop.xlane.xlu0 %876
    %878 = vmax.xlane.f32.xlu0 %v875
    %v879 = vpop.xlane.xlu0 %878
    %vm880 = vcmask 261368
    %881 = vst.msk [vmem:[#allocation2] sm:$0xff] %vm880, %v877
    %882 = vst.msk [vmem:[#allocation2 + $0x8] sm:$0xff] %vm880, %v879
    %v883 = vld [vmem:[#allocation2] sm:$0xff]
    %v884 = vld [vmem:[#allocation2 + $0x8] sm:$0xff]
    %v885 = vld [vmem:[%s2] sm:$0x1]
    %v887 = vlaneseq
    %v888 = vshrl.u32 %v887, 7
    %v889 = vsub.s32 0, %v888
    %v890 = vrot.slane %v885, %v889
    %v892 = vadd.f32 %v883, %v890
    %v893 = vadd.f32 %v884, %v890
    %v894 = vmax.f32 %v892, 0.0
    %v895 = vmax.f32 %v893, 0.0
    %v896 = vld [vmem:[#allocation9] sm:$0xff]
    %v897 = vld [vmem:[#allocation9 + $0x8] sm:$0xff]
    %v898 = vld [vmem:[#allocation9 + $0x10] sm:$0xff]
    %v899 = vld [vmem:[#allocation9 + $0x18] sm:$0xff]
    %v900 = vld [vmem:[%s4] sm:$0x1]
    %v902 = vlaneseq
    %v903 = vshrl.u32 %v902, 7
    %v904 = vsub.s32 0, %v903
    %v905 = vrot.slane %v900, %v904
    %vm907 = vcmask 261120
    %v909 = vsel %vm907, %v894, 0
    %v912 = vsel %vm907, %v895, 0
    %914 = vmatprep.subr.mxu0 0.0
    %915 = vmatpush1.msra.mxu0 %v896
    %916 = vmatprep.subr.mxu0 0.0
    %917 = vmatpush1.msra.mxu0 %v897
    %918 = vmatprep.subr.mxu0 0.0
    %919 = vmatpush1.msra.mxu0 %v898
    %920 = vmatprep.subr.mxu0 0.0
    %921 = vmatpush1.msra.mxu0 %v899
    %922 = vmatprep.subr.mxu0 0.0
    %923 = vmatpush1.msra.mxu0 0.0
    %924 = vmatprep.subr.mxu0 0.0
    %925 = vmatpush1.msra.mxu0 0.0
    %926 = vmatprep.subr.mxu0 0.0
    %927 = vmatpush1.msra.mxu0 0.0
    %928 = vmatprep.subr.mxu0 0.0
    %929 = vmatpush1.msra.mxu0 0.0
    %930 = vmatprep.subr.mxu0 0.0
    %931 = vmatpush1.msra.mxu0 0.0
    %932 = vmatprep.subr.mxu0 0.0
    %933 = vmatpush1.msra.mxu0 0.0
    %934 = vmatprep.subr.mxu0 0.0
    %935 = vmatpush1.msra.mxu0 0.0
    %936 = vmatprep.subr.mxu0 0.0
    %937 = vmatpush1.msra.mxu0 0.0
    %938 = vmatprep.subr.mxu0 0.0
    %939 = vmatpush1.msra.mxu0 0.0
    %940 = vmatprep.subr.mxu0 0.0
    %941 = vmatpush1.msra.mxu0 0.0
    %942 = vmatprep.subr.mxu0 0.0
    %943 = vmatpush1.msra.mxu0 0.0
    %944 = vmatprep.subr.mxu0 0.0
    %945 = vmatpush1.msra.mxu0 0.0
    %946 = vmatprep.subr.mxu0 0.0
    %947 = vmatpush1.msra.mxu0 0.0
    %948 = vmatprep.subr.mxu0 0.0
    %949 = vmatpush1.msra.mxu0 0.0
    %950 = vmatprep.subr.mxu0 0.0
    %951 = vmatpush1.msra.mxu0 0.0
    %952 = vmatprep.subr.mxu0 0.0
    %953 = vmatpush1.msra.mxu0 0.0
    %954 = vmatprep.subr.mxu0 0.0
    %955 = vmatpush1.msra.mxu0 0.0
    %956 = vmatprep.subr.mxu0 0.0
    %957 = vmatpush1.msra.mxu0 0.0
    %958 = vmatprep.subr.mxu0 0.0
    %959 = vmatpush1.msra.mxu0 0.0
    %960 = vmatprep.subr.mxu0 0.0
    %961 = vmatpush1.msra.mxu0 0.0
    %962 = vmatprep.subr.mxu0 0.0
    %963 = vmatpush1.msra.mxu0 0.0
    %964 = vmatprep.subr.mxu0 0.0
    %965 = vmatpush1.msra.mxu0 0.0
    %966 = vmatprep.subr.mxu0 0.0
    %967 = vmatpush1.msra.mxu0 0.0
    %968 = vmatprep.subr.mxu0 0.0
    %969 = vmatpush1.msra.mxu0 0.0
    %970 = vmatprep.subr.mxu0 0.0
    %971 = vmatpush1.msra.mxu0 0.0
    %972 = vmatprep.subr.mxu0 0.0
    %973 = vmatpush1.msra.mxu0 0.0
    %974 = vmatprep.subr.mxu0 0.0
    %975 = vmatpush1.msra.mxu0 0.0
    %976 = vmatprep.subr.mxu0 0.0
    %977 = vmatpush1.msra.mxu0 0.0
    %978 = vmatprep.mubr.f32.mxu0 0.0
    %979 = vmatmul.mubr.f32.gmra.mrb[0].mxu0 %v909
    %v980 = vpop.f32.mrb[0].mxu0
    %v981 = vadd.f32 %v905, %v980
    %v982 = vpop.f32.mrb[0].mxu0
    %983 = vmatprep.mubr.f32.mxu0 0.0
    %984 = vmatmul.mubr.f32.gmra.mrb[0].mxu0 %v912
    %v985 = vpop.f32.mrb[0].mxu0
    %v986 = vadd.f32 %v905, %v985
    %v987 = vpop.f32.mrb[0].mxu0
    %988 = vdwg.mxu0
    %v989 = vmax.f32 %v981, 0.0
    %v990 = vmax.f32 %v986, 0.0
    %v991 = vld [vmem:[%s5] sm:$0x1]
    %v993 = vlaneseq
    %v994 = vshrl.u32 %v993, 7
    %v995 = vsub.s32 0, %v994
    %v996 = vrot.slane %v991, %v995
    %v998 = vmul.f32 %v989, %v996
    %v999 = vmul.f32 %v990, %v996
    %v1000 = vsel %vm907, %v998, 0.0
    %1001 = vadd.xlane.f32.xlu0 %v1000
    %v1002 = vpop.xlane.xlu0 %1001
    %v1003 = vsel %vm907, %v999, 0.0
    %1004 = vadd.xlane.f32.xlu0 %v1003
    %v1005 = vpop.xlane.xlu0 %1004
    %v1006 = vld [vmem:[#allocation3] sm:$0x1]
    %v1008 = vlaneseq
    %v1009 = vshrl.u32 %v1008, 7
    %v1010 = vsub.s32 0, %v1009
    %v1011 = vrot.slane %v1006, %v1010
    %v1013 = vadd.f32 %v1002, %v1011
    %v1014 = vadd.f32 %v1005, %v1011
    %v1015 = vxor.u32 %v1013, 2147483648
    %v1016 = vxor.u32 %v1014, 2147483648
    %v1017 = vmul.f32 %v1015, 1.442695
    %v1018 = vpow.pop %v1017
    %v1019 = vmul.f32 %v1016, 1.442695
    %v1020 = vpow.pop %v1019
    %v1021 = vadd.f32 %v1018, 1.0
    %v1022 = vadd.f32 %v1020, 1.0
    %v1023 = vrcp.pop %v1021
    %v1024 = vmul.f32 1.0, %v1023
    %v1025 = vrcp.pop %v1022
    %v1026 = vmul.f32 1.0, %v1025
    %1028 = vset.pattern.permute.xlu0 0
    %1029 = vperm.xlu0 %1028, %v1024
    %v1030 = vpop.permute.xlu0 %1029
    %1033 = vset.pattern.permute.xlu0 0
    %1034 = vperm.xlu0 %1033, %v1026
    %v1035 = vpop.permute.xlu0 %1034
    %1037 = vst [vmem:[#allocation11] sm:$0xff] %v1030
    %1038 = vst [vmem:[#allocation11 + $0x8] sm:$0xff] %v1035
    // Predicated region
    $region42: #{tpu_custom_call.1} parent=1 // pred_check
      _
    $region43: #{tpu_custom_call.1} parent=1 // pred_check_branch
      %1040 = sbr.rel (0) target = $region45
    $region44: #{tpu_custom_call.1} parent=1 // pred_region
      %s1042 = ssub.s32 256, 256
      %1043 = vsyncadd [#allocation6], %s1042
      %s1044 = sshll.u32 [#allocation11], 4
      %s1045 = int_to_ptr.vmem [resolvable:$true] %s1044
      %1050 = dma.vmem_to_hbm [thread:$0]  %s1045, 256, %s7, [#allocation6], 128, 128, 8
    $region45: #{tpu_custom_call.1} parent=1 // pred_fallthru
      _
    // Predicated region
    $region46: #{tpu_custom_call.1} parent=1 // pred_check
      _
    $region47: #{tpu_custom_call.1} parent=1 // pred_check_branch
      %1052 = sbr.rel (0) target = $region49
    $region48: #{tpu_custom_call.1} parent=1 // pred_region
      %1053 = dma.done [#allocation6], 256
    $region49: #{tpu_custom_call.1} parent=1 // pred_fallthru
      _
    %1054 = vsyncpa [#allocation5], 1
    %1055 = vsyncpa [#allocation10], 1
    %1056 = vsyncpa [#allocation6], 1
    %1057 = vsyncpa [#allocation7], 1

</llo_original>
